<compile_context>
chip_gen: v7x
topology: tpu7x:2x2x1
jax: 0.10.0
libtpu: 0.0.40
codegen_flags: <defaults>
</compile_context>

<pallas_src>
import math
import numpy as np
import jax
import jax.numpy as jnp
from jax.experimental import pallas as pl
from jax.experimental.pallas import tpu as pltpu

# ---- small, falcon-shaped hyperparameters (synthetic) -----------------------
B = 2                        # batch
S = 8                        # sequence length
H = 32                       # hidden size
N_HEAD = 4                   # query heads
HEAD_DIM = H // N_HEAD       # 8
FFN = 4 * H                  # 128
LN_EPS = 1e-5

TOK = B * S                  # 16 tokens per call
PACK = 4                     # tokens packed per 128-lane output row
ROWS = TOK // PACK           # 4 output rows
QW = N_HEAD * HEAD_DIM       # 32 query lanes (all heads)
KW = N_HEAD * HEAD_DIM       # 32 key lanes  (shared k head replicated 4x)
QKW = QW + KW                # 64 rotary lanes
FUSED = FFN + QKW + HEAD_DIM  # [W1 | Wq | Wk x4 | Wv] = 200 fused lanes


# =============================== Pallas kernel ===============================
def falcon_decoder_kernel(x_ref, wf_ref, bf_ref, rot_ref, cos_ref, sin_ref,
                          rowrep_ref, hmask_ref, bias_ref, wow_ref, w2_ref,
                          sel_ref, o_ref):
    """Single invocation; whole (TOK, H) activation slab + weights in VMEM."""
    x = x_ref[...]                                         # (16, 32) f32

    # ---------------- input LayerNorm (gamma/beta folded into wf/bf) ----------------
    mean = jnp.mean(x, axis=-1, keepdims=True)
    xc = x - mean
    var = jnp.mean(xc * xc, axis=-1, keepdims=True)
    xhat = xc * jax.lax.rsqrt(var + LN_EPS)                # (16, 32) f32

    # ---------------- ONE fused projection: [W1 | Wq | Wk x4 | Wv] ----------------
    # bf16 operands, f32 accumulation on the MXU.
    proj = jnp.dot(xhat.astype(jnp.bfloat16), wf_ref[...],
                   preferred_element_type=jnp.float32) + bf_ref[...]    # (16, 200)
    h1 = proj[:, :FFN]                                     # (16, 128) lane-tile aligned
    qk = proj[:, FFN:FFN + QKW]                            # (16, 64)  offset 128
    v = proj[:, FFN + QKW:]                                # (16, 8)

    # ---------------- rotary for all q heads + replicated k in one (16,64) op ----------------
    qk_rot = qk * cos_ref[...] + jnp.dot(
        qk, rot_ref[...], preferred_element_type=jnp.float32) * sin_ref[...]
    q_rot = qk_rot[:, :QW]                                 # (16, 32)
    k_wide = qk_rot[:, QW:]                                # (16, 32) = rope(k) per head block

    # ---------------- multi-query attention, all heads & batches at once ----------------
    # Head stacking on the MXU (no lane-slice concatenates):
    #   q_stack[n*TOK + t, :] = q_rot[t, :]
    q_stack = jnp.dot(rowrep_ref[...], q_rot,
                      preferred_element_type=jnp.float32)               # (64, 32)
    # Per-row-block head selection; 1/sqrt(d) is folded into the mask values.
    q_m = (q_stack * hmask_ref[...]).astype(jnp.bfloat16)               # (64, 32)

    s = jnp.einsum("rj,kj->rk", q_m, k_wide.astype(jnp.bfloat16),
                   preferred_element_type=jnp.float32) + bias_ref[...]  # (64, 16)
    m = jnp.max(s, axis=-1, keepdims=True)
    p = jnp.exp(s - m)
    p = p * pl.reciprocal(jnp.sum(p, axis=-1, keepdims=True), approx=True)
    p = p.astype(jnp.bfloat16)                                          # (64, 16)

    # Wo folded into a lane-dense (8, 128) weight: vW = v @ Wo_wide once,
    # then per-head contributions use sublane-aligned 16-row slices of p.
    vW = jnp.dot(v.astype(jnp.bfloat16), wow_ref[...],
                 preferred_element_type=jnp.float32).astype(jnp.bfloat16)  # (16, 128)
    attn_out = jnp.dot(p[:TOK, :], vW[:, :H], preferred_element_type=jnp.float32)
    for n in range(1, N_HEAD):
        attn_out = attn_out + jnp.dot(p[n * TOK:(n + 1) * TOK, :],
                                      vW[:, n * H:(n + 1) * H],
                                      preferred_element_type=jnp.float32)  # (16, 32)

    # ---------------- MLP branch (exact erf GELU, matches nn.GELU) ----------------
    g = 0.5 * h1 * (1.0 + jax.lax.erf(h1 * 0.7071067811865476))         # f32
    mlp_out = jnp.dot(g.astype(jnp.bfloat16), w2_ref[...],
                      preferred_element_type=jnp.float32)               # (16, 32)

    # ---------------- parallel residual, then lane-dense packing ----------------
    delta = x + attn_out + mlp_out                                      # (16, 32) f32
    sel = sel_ref[...]                                                  # (16, 16) f32 0/1
    # packed[r, t*H + j] = delta[r*PACK + t, j]; done with exact f32 MXU
    # selection matmuls so the final store is one unmasked (4, 128) vst.
    packed = jnp.concatenate(
        [jnp.dot(sel[t * ROWS:(t + 1) * ROWS, :], delta,
                 preferred_element_type=jnp.float32) for t in range(PACK)],
        axis=1)                                                         # (4, 128)
    o_ref[...] = packed


# =============================== host-side constants ===============================
def _rope_tables():
    """rotate_half matrix and falcon rotary cos/sin tables (numpy, f32)."""
    half = HEAD_DIM // 2
    R = np.zeros((HEAD_DIM, HEAD_DIM), np.float32)
    R[half:, :half] = -np.eye(half, dtype=np.float32)
    R[:half, half:] = np.eye(half, dtype=np.float32)
    inv_freq = (1.0 / (10000.0 ** (np.arange(0, half, dtype=np.float32)
                                   * 2.0 / HEAD_DIM))).astype(np.float32)
    freqs = np.outer(np.arange(S, dtype=np.float32), inv_freq)
    emb = np.concatenate([freqs, freqs], axis=-1)          # (S, HEAD_DIM)
    return R, np.cos(emb).astype(np.float32), np.sin(emb).astype(np.float32)


def _kernel_constants():
    """Rotary / head-stacking / masking / packing constants (numpy, f32)."""
    R, cos, sin = _rope_tables()
    scale = 1.0 / math.sqrt(HEAD_DIM)

    # Block-diagonal rotate_half over [4 q-head blocks | 4 replicated k blocks].
    rot_qk = np.zeros((QKW, QKW), np.float32)
    for blk in range(2 * N_HEAD):
        rot_qk[blk * HEAD_DIM:(blk + 1) * HEAD_DIM,
               blk * HEAD_DIM:(blk + 1) * HEAD_DIM] = R

    # cos/sin tiled over the 8 blocks and over batch -> (TOK, 64).
    cos_row = np.tile(cos, (1, 2 * N_HEAD))
    sin_row = np.tile(sin, (1, 2 * N_HEAD))
    cos_qk = np.tile(cos_row, (B, 1)).astype(np.float32)
    sin_qk = np.tile(sin_row, (B, 1)).astype(np.float32)

    # MXU head stacking: q_stack[n*TOK + t, :] = q_rot[t, :].
    rowrep = np.zeros((N_HEAD * TOK, TOK), np.float32)
    for n in range(N_HEAD):
        rowrep[n * TOK:(n + 1) * TOK, :] = np.eye(TOK, dtype=np.float32)

    # Head-selection mask with 1/sqrt(d) folded in: row block n keeps head-n lanes.
    hmask = np.zeros((N_HEAD * TOK, QW), np.float32)
    for n in range(N_HEAD):
        hmask[n * TOK:(n + 1) * TOK, n * HEAD_DIM:(n + 1) * HEAD_DIM] = scale

    # Additive attention bias over all B*S keys:
    #   row = n*TOK + b*S + s, col = b'*S + t; allow iff b'==b and t<=s.
    r = np.arange(N_HEAD * TOK)
    b_r = (r % TOK) // S
    s_r = r % S
    c = np.arange(TOK)
    b_c = c // S
    t_c = c % S
    allowed = (b_c[None, :] == b_r[:, None]) & (t_c[None, :] <= s_r[:, None])
    attn_bias = np.where(allowed, 0.0, -1e30).astype(np.float32)   # (64, 16)

    # Output packing selector: sel[t*ROWS + r, q] = 1 iff q == r*PACK + t.
    sel = np.zeros((PACK * ROWS, TOK), np.float32)
    for t in range(PACK):
        for rr in range(ROWS):
            sel[t * ROWS + rr, rr * PACK + t] = 1.0

    return rot_qk, cos_qk, sin_qk, rowrep, hmask, attn_bias, sel


# Advisory cost estimate for XLA's scheduler.
_FLOPS = 2 * (TOK * H * FUSED                 # fused projection
              + TOK * QKW * QKW               # rotary rotate-half matmul
              + (N_HEAD * TOK) * TOK * QW     # head stacking (rowrep)
              + (N_HEAD * TOK) * QW * TOK     # scores
              + TOK * HEAD_DIM * (N_HEAD * H)  # v @ Wo_wide
              + N_HEAD * TOK * TOK * H        # per-head p @ vW_n
              + TOK * FFN * H                 # MLP down-projection
              + PACK * ROWS * TOK * H)        # output packing
_TRANS = N_HEAD * TOK * TOK + TOK * FFN + TOK + N_HEAD * TOK


# =============================== wrapper ===============================
@jax.jit
def falcon_decoder(x, params):
    """x: (B, S, H) f32. params: dict of raw f32 weights. Returns (B, S, H) f32."""
    assert x.shape == (B, S, H)
    rot_qk, cos_qk, sin_qk, rowrep, hmask, attn_bias, sel = _kernel_constants()

    # Fuse [W1 | Wq | Wk x4 | Wv], fold LayerNorm gamma/beta into weight/bias,
    # cast weights to bf16 (matmul operands); bias stays f32 (added to f32 acc).
    wk_rep = jnp.concatenate([params["wk"]] * N_HEAD, axis=1)                 # (H, 32)
    w_cat = jnp.concatenate([params["w1"], params["wq"], wk_rep, params["wv"]],
                            axis=1)                                           # (H, 200)
    w_fused = (params["ln_w"][:, None] * w_cat).astype(jnp.bfloat16)          # (H, 200)
    b_fused = (params["ln_b"][None, :] @ w_cat).astype(jnp.float32)           # (1, 200)

    # Lane-dense Wo: wo_wide[:, n*H:(n+1)*H] = Wo[n*HEAD_DIM:(n+1)*HEAD_DIM, :].
    wo_wide = jnp.concatenate(
        [params["wo"][n * HEAD_DIM:(n + 1) * HEAD_DIM, :] for n in range(N_HEAD)],
        axis=1).astype(jnp.bfloat16)                                          # (8, 128)
    w2 = params["w2"].astype(jnp.bfloat16)                                    # (128, 32)

    x2 = x.reshape(TOK, H)      # free row-major reshape on the host side

    operands = (x2, w_fused, b_fused, rot_qk, cos_qk, sin_qk,
                rowrep, hmask, attn_bias, wo_wide, w2, sel)
    bytes_accessed = sum(int(a.size) * a.dtype.itemsize for a in operands)
    bytes_accessed += ROWS * PACK * H * 4    # output

    vmem_spec = pl.BlockSpec(memory_space=pltpu.MemorySpace.VMEM)
    out_packed = pl.pallas_call(
        falcon_decoder_kernel,
        out_shape=jax.ShapeDtypeStruct((ROWS, PACK * H), jnp.float32),   # (4, 128)
        in_specs=[vmem_spec] * len(operands),
        out_specs=vmem_spec,
        compiler_params=pltpu.CompilerParams(vmem_limit_bytes=32 * 1024 * 1024),
        cost_estimate=pl.CostEstimate(flops=_FLOPS, transcendentals=_TRANS,
                                      bytes_accessed=bytes_accessed),
    )(*operands)

    # (4, 128) row-major == (B*S, H) row-major -> direct reshape back.
    return out_packed.reshape(B, S, H)


# =============================== pure-JAX reference ===============================
def falcon_decoder_ref(x, params):
    R, cos, sin = _rope_tables()
    R, cos, sin = jnp.asarray(R), jnp.asarray(cos), jnp.asarray(sin)

    mean = jnp.mean(x, axis=-1, keepdims=True)
    xc = x - mean
    var = jnp.mean(xc * xc, axis=-1, keepdims=True)
    ln = xc * jax.lax.rsqrt(var + LN_EPS) * params["ln_w"] + params["ln_b"]

    q = ln @ params["wq"]                     # (B, S, N_HEAD*HEAD_DIM)
    k = ln @ params["wk"]                     # (B, S, HEAD_DIM)
    v = ln @ params["wv"]

    rope = lambda t: t * cos + (t @ R) * sin
    k = rope(k)
    q = q.reshape(B, S, N_HEAD, HEAD_DIM).transpose(0, 2, 1, 3)   # (B, NH, S, HD)
    q = rope(q)

    scale = 1.0 / math.sqrt(HEAD_DIM)
    s = jnp.einsum("bhqd,bkd->bhqk", q, k) * scale
    mask = jnp.tril(jnp.ones((S, S), dtype=bool))
    s = jnp.where(mask, s, -1e30)
    p = jax.nn.softmax(s, axis=-1)
    o = jnp.einsum("bhqk,bkd->bhqd", p, v)
    o = o.transpose(0, 2, 1, 3).reshape(B, S, N_HEAD * HEAD_DIM)
    attn_out = o @ params["wo"]

    h1 = ln @ params["w1"]
    g = 0.5 * h1 * (1.0 + jax.lax.erf(h1 * 0.7071067811865476))
    mlp_out = g @ params["w2"]
    return x + attn_out + mlp_out


# =============================== parameter / input setup ===============================
def make_params():
    key = jax.random.PRNGKey(0)
    ks = jax.random.split(key, 9)
    std = 0.02
    return {
        "ln_w": 1.0 + 0.1 * jax.random.normal(ks[6], (H,), jnp.float32),
        "ln_b": 0.1 * jax.random.normal(ks[7], (H,), jnp.float32),
        "wq": std * jax.random.normal(ks[0], (H, N_HEAD * HEAD_DIM), jnp.float32),
        "wk": std * jax.random.normal(ks[1], (H, HEAD_DIM), jnp.float32),
        "wv": std * jax.random.normal(ks[2], (H, HEAD_DIM), jnp.float32),
        "wo": std * jax.random.normal(ks[3], (N_HEAD * HEAD_DIM, H), jnp.float32),
        "w1": std * jax.random.normal(ks[4], (H, FFN), jnp.float32),
        "w2": std * jax.random.normal(ks[5], (FFN, H), jnp.float32),
    }


if __name__ == "__main__":
    params = make_params()
    x = jax.random.normal(jax.random.PRNGKey(0), (B, S, H), jnp.float32)

    out = jax.block_until_ready(falcon_decoder(x, params))
    ref = falcon_decoder_ref(x, params)

    assert out.shape == (B, S, H)
    # bf16 matmul operands (f32 accumulation) vs f32 reference -> ~1e-3 abs error.
    np.testing.assert_allclose(np.asarray(out), np.asarray(ref), atol=5e-3, rtol=5e-3)
    print("KERNEL_OK")
</pallas_src>

<mosaic_0001>
module attributes {stable_mosaic.version = 11 : i64} {
  func.func @falcon_decoder_kernel(%arg0: memref<16x32xf32, #tpu.memory_space<vmem>>, %arg1: memref<32x200xbf16, #tpu.memory_space<vmem>>, %arg2: memref<1x200xf32, #tpu.memory_space<vmem>>, %arg3: memref<64x64xf32, #tpu.memory_space<vmem>>, %arg4: memref<16x64xf32, #tpu.memory_space<vmem>>, %arg5: memref<16x64xf32, #tpu.memory_space<vmem>>, %arg6: memref<64x16xf32, #tpu.memory_space<vmem>>, %arg7: memref<64x32xf32, #tpu.memory_space<vmem>>, %arg8: memref<64x16xf32, #tpu.memory_space<vmem>>, %arg9: memref<8x128xbf16, #tpu.memory_space<vmem>>, %arg10: memref<128x32xbf16, #tpu.memory_space<vmem>>, %arg11: memref<16x16xf32, #tpu.memory_space<vmem>>, %arg12: memref<4x128xf32, #tpu.memory_space<vmem>>) attributes {dimension_semantics = [], scalar_prefetch = 0 : i64, scratch_operands = 0 : i64, tpu.core_type = #tpu.core_type<tc>} {
    %c0 = arith.constant 0 : index
    %c0_0 = arith.constant 0 : index
    %0 = vector.load %arg0[%c0, %c0_0] : memref<16x32xf32, #tpu.memory_space<vmem>>, vector<16x32xf32>
    %cst = arith.constant dense<0.000000e+00> : vector<16xf32>
    %1 = vector.multi_reduction <add>, %0, %cst [1] : vector<16x32xf32> to vector<16xf32>
    %2 = vector.shape_cast %1 : vector<16xf32> to vector<16x1xf32>
    %cst_1 = arith.constant 3.200000e+01 : f32
    %3 = vector.broadcast %cst_1 : f32 to vector<16x1xf32>
    %4 = arith.divf %2, %3 : vector<16x1xf32>
    %5 = vector.broadcast %4 : vector<16x1xf32> to vector<16x32xf32>
    %6 = arith.subf %0, %5 : vector<16x32xf32>
    %7 = arith.mulf %6, %6 : vector<16x32xf32>
    %cst_2 = arith.constant dense<0.000000e+00> : vector<16xf32>
    %8 = vector.multi_reduction <add>, %7, %cst_2 [1] : vector<16x32xf32> to vector<16xf32>
    %9 = vector.shape_cast %8 : vector<16xf32> to vector<16x1xf32>
    %cst_3 = arith.constant 3.200000e+01 : f32
    %10 = vector.broadcast %cst_3 : f32 to vector<16x1xf32>
    %11 = arith.divf %9, %10 : vector<16x1xf32>
    %cst_4 = arith.constant 9.99999974E-6 : f32
    %12 = vector.broadcast %cst_4 : f32 to vector<16x1xf32>
    %13 = arith.addf %11, %12 : vector<16x1xf32>
    %14 = math.rsqrt %13 : vector<16x1xf32>
    %15 = vector.broadcast %14 : vector<16x1xf32> to vector<16x32xf32>
    %16 = arith.mulf %6, %15 : vector<16x32xf32>
    %17 = arith.truncf %16 : vector<16x32xf32> to vector<16x32xbf16>
    %c0_5 = arith.constant 0 : index
    %c0_6 = arith.constant 0 : index
    %18 = vector.load %arg1[%c0_5, %c0_6] : memref<32x200xbf16, #tpu.memory_space<vmem>>, vector<32x200xbf16>
    %cst_7 = arith.constant dense<0.000000e+00> : vector<16x200xf32>
    %19 = tpu.matmul %17, %18, %cst_7 {dimension_numbers = #tpu.dot_dimension_numbers<[1], [0], [0], [1], [0, 0, 1, 1], [], []>} : vector<16x32xbf16>, vector<32x200xbf16>, vector<16x200xf32> -> vector<16x200xf32>
    %c0_8 = arith.constant 0 : index
    %c0_9 = arith.constant 0 : index
    %20 = vector.load %arg2[%c0_8, %c0_9] : memref<1x200xf32, #tpu.memory_space<vmem>>, vector<1x200xf32>
    %21 = vector.broadcast %20 : vector<1x200xf32> to vector<16x200xf32>
    %22 = arith.addf %19, %21 : vector<16x200xf32>
    %23 = vector.extract_strided_slice %22 {offsets = [0, 0], sizes = [16, 128], strides = [1, 1]} : vector<16x200xf32> to vector<16x128xf32>
    %24 = vector.extract_strided_slice %22 {offsets = [0, 128], sizes = [16, 64], strides = [1, 1]} : vector<16x200xf32> to vector<16x64xf32>
    %25 = vector.extract_strided_slice %22 {offsets = [0, 192], sizes = [16, 8], strides = [1, 1]} : vector<16x200xf32> to vector<16x8xf32>
    %c0_10 = arith.constant 0 : index
    %c0_11 = arith.constant 0 : index
    %26 = vector.load %arg4[%c0_10, %c0_11] : memref<16x64xf32, #tpu.memory_space<vmem>>, vector<16x64xf32>
    %27 = arith.mulf %24, %26 : vector<16x64xf32>
    %c0_12 = arith.constant 0 : index
    %c0_13 = arith.constant 0 : index
    %28 = vector.load %arg3[%c0_12, %c0_13] : memref<64x64xf32, #tpu.memory_space<vmem>>, vector<64x64xf32>
    %cst_14 = arith.constant dense<0.000000e+00> : vector<16x64xf32>
    %29 = tpu.matmul %24, %28, %cst_14 {dimension_numbers = #tpu.dot_dimension_numbers<[1], [0], [0], [1], [0, 0, 1, 1], [], []>} : vector<16x64xf32>, vector<64x64xf32>, vector<16x64xf32> -> vector<16x64xf32>
    %c0_15 = arith.constant 0 : index
    %c0_16 = arith.constant 0 : index
    %30 = vector.load %arg5[%c0_15, %c0_16] : memref<16x64xf32, #tpu.memory_space<vmem>>, vector<16x64xf32>
    %31 = arith.mulf %29, %30 : vector<16x64xf32>
    %32 = arith.addf %27, %31 : vector<16x64xf32>
    %33 = vector.extract_strided_slice %32 {offsets = [0, 0], sizes = [16, 32], strides = [1, 1]} : vector<16x64xf32> to vector<16x32xf32>
    %34 = vector.extract_strided_slice %32 {offsets = [0, 32], sizes = [16, 32], strides = [1, 1]} : vector<16x64xf32> to vector<16x32xf32>
    %c0_17 = arith.constant 0 : index
    %c0_18 = arith.constant 0 : index
    %35 = vector.load %arg6[%c0_17, %c0_18] : memref<64x16xf32, #tpu.memory_space<vmem>>, vector<64x16xf32>
    %cst_19 = arith.constant dense<0.000000e+00> : vector<64x32xf32>
    %36 = tpu.matmul %35, %33, %cst_19 {dimension_numbers = #tpu.dot_dimension_numbers<[1], [0], [0], [1], [0, 0, 1, 1], [], []>} : vector<64x16xf32>, vector<16x32xf32>, vector<64x32xf32> -> vector<64x32xf32>
    %c0_20 = arith.constant 0 : index
    %c0_21 = arith.constant 0 : index
    %37 = vector.load %arg7[%c0_20, %c0_21] : memref<64x32xf32, #tpu.memory_space<vmem>>, vector<64x32xf32>
    %38 = arith.mulf %36, %37 : vector<64x32xf32>
    %39 = arith.truncf %38 : vector<64x32xf32> to vector<64x32xbf16>
    %40 = arith.truncf %34 : vector<16x32xf32> to vector<16x32xbf16>
    "tpu.trace_start"() <{level = 10 : i32, message = "rj,kj->rk"}> : () -> ()
    %cst_22 = arith.constant dense<0.000000e+00> : vector<64x16xf32>
    %41 = tpu.matmul %39, %40, %cst_22 {dimension_numbers = #tpu.dot_dimension_numbers<[1], [1], [0], [0], [0, 0, 1, 0], [], []>} : vector<64x32xbf16>, vector<16x32xbf16>, vector<64x16xf32> -> vector<64x16xf32>
    "tpu.trace_stop"() : () -> ()
    %c0_23 = arith.constant 0 : index
    %c0_24 = arith.constant 0 : index
    %42 = vector.load %arg8[%c0_23, %c0_24] : memref<64x16xf32, #tpu.memory_space<vmem>>, vector<64x16xf32>
    %43 = arith.addf %41, %42 : vector<64x16xf32>
    %cst_25 = arith.constant dense<0xFF800000> : vector<64xf32>
    %44 = vector.multi_reduction <maximumf>, %43, %cst_25 [1] : vector<64x16xf32> to vector<64xf32>
    %45 = vector.shape_cast %44 : vector<64xf32> to vector<64x1xf32>
    %46 = vector.broadcast %45 : vector<64x1xf32> to vector<64x16xf32>
    %47 = arith.subf %43, %46 : vector<64x16xf32>
    %48 = math.exp %47 : vector<64x16xf32>
    %cst_26 = arith.constant dense<0.000000e+00> : vector<64xf32>
    %49 = vector.multi_reduction <add>, %48, %cst_26 [1] : vector<64x16xf32> to vector<64xf32>
    %50 = vector.shape_cast %49 : vector<64xf32> to vector<64x1xf32>
    %51 = tpu.reciprocal %50 {approx = true} : vector<64x1xf32> -> vector<64x1xf32>
    %52 = vector.broadcast %51 : vector<64x1xf32> to vector<64x16xf32>
    %53 = arith.mulf %48, %52 : vector<64x16xf32>
    %54 = arith.truncf %53 : vector<64x16xf32> to vector<64x16xbf16>
    %55 = arith.truncf %25 : vector<16x8xf32> to vector<16x8xbf16>
    %c0_27 = arith.constant 0 : index
    %c0_28 = arith.constant 0 : index
    %56 = vector.load %arg9[%c0_27, %c0_28] : memref<8x128xbf16, #tpu.memory_space<vmem>>, vector<8x128xbf16>
    %cst_29 = arith.constant dense<0.000000e+00> : vector<16x128xf32>
    %57 = tpu.matmul %55, %56, %cst_29 {dimension_numbers = #tpu.dot_dimension_numbers<[1], [0], [0], [1], [0, 0, 1, 1], [], []>} : vector<16x8xbf16>, vector<8x128xbf16>, vector<16x128xf32> -> vector<16x128xf32>
    %58 = arith.truncf %57 : vector<16x128xf32> to vector<16x128xbf16>
    %59 = vector.extract_strided_slice %54 {offsets = [0, 0], sizes = [16, 16], strides = [1, 1]} : vector<64x16xbf16> to vector<16x16xbf16>
    %60 = vector.extract_strided_slice %58 {offsets = [0, 0], sizes = [16, 32], strides = [1, 1]} : vector<16x128xbf16> to vector<16x32xbf16>
    %cst_30 = arith.constant dense<0.000000e+00> : vector<16x32xf32>
    %61 = tpu.matmul %59, %60, %cst_30 {dimension_numbers = #tpu.dot_dimension_numbers<[1], [0], [0], [1], [0, 0, 1, 1], [], []>} : vector<16x16xbf16>, vector<16x32xbf16>, vector<16x32xf32> -> vector<16x32xf32>
    %62 = vector.extract_strided_slice %54 {offsets = [16, 0], sizes = [16, 16], strides = [1, 1]} : vector<64x16xbf16> to vector<16x16xbf16>
    %63 = vector.extract_strided_slice %58 {offsets = [0, 32], sizes = [16, 32], strides = [1, 1]} : vector<16x128xbf16> to vector<16x32xbf16>
    %cst_31 = arith.constant dense<0.000000e+00> : vector<16x32xf32>
    %64 = tpu.matmul %62, %63, %cst_31 {dimension_numbers = #tpu.dot_dimension_numbers<[1], [0], [0], [1], [0, 0, 1, 1], [], []>} : vector<16x16xbf16>, vector<16x32xbf16>, vector<16x32xf32> -> vector<16x32xf32>
    %65 = arith.addf %61, %64 : vector<16x32xf32>
    %66 = vector.extract_strided_slice %54 {offsets = [32, 0], sizes = [16, 16], strides = [1, 1]} : vector<64x16xbf16> to vector<16x16xbf16>
    %67 = vector.extract_strided_slice %58 {offsets = [0, 64], sizes = [16, 32], strides = [1, 1]} : vector<16x128xbf16> to vector<16x32xbf16>
    %cst_32 = arith.constant dense<0.000000e+00> : vector<16x32xf32>
    %68 = tpu.matmul %66, %67, %cst_32 {dimension_numbers = #tpu.dot_dimension_numbers<[1], [0], [0], [1], [0, 0, 1, 1], [], []>} : vector<16x16xbf16>, vector<16x32xbf16>, vector<16x32xf32> -> vector<16x32xf32>
    %69 = arith.addf %65, %68 : vector<16x32xf32>
    %70 = vector.extract_strided_slice %54 {offsets = [48, 0], sizes = [16, 16], strides = [1, 1]} : vector<64x16xbf16> to vector<16x16xbf16>
    %71 = vector.extract_strided_slice %58 {offsets = [0, 96], sizes = [16, 32], strides = [1, 1]} : vector<16x128xbf16> to vector<16x32xbf16>
    %cst_33 = arith.constant dense<0.000000e+00> : vector<16x32xf32>
    %72 = tpu.matmul %70, %71, %cst_33 {dimension_numbers = #tpu.dot_dimension_numbers<[1], [0], [0], [1], [0, 0, 1, 1], [], []>} : vector<16x16xbf16>, vector<16x32xbf16>, vector<16x32xf32> -> vector<16x32xf32>
    %73 = arith.addf %69, %72 : vector<16x32xf32>
    %cst_34 = arith.constant 5.000000e-01 : f32
    %74 = vector.broadcast %cst_34 : f32 to vector<16x128xf32>
    %75 = arith.mulf %74, %23 : vector<16x128xf32>
    %cst_35 = arith.constant 0.707106769 : f32
    %76 = vector.broadcast %cst_35 : f32 to vector<16x128xf32>
    %77 = arith.mulf %23, %76 : vector<16x128xf32>
    %78 = math.erf %77 : vector<16x128xf32>
    %cst_36 = arith.constant 1.000000e+00 : f32
    %79 = vector.broadcast %cst_36 : f32 to vector<16x128xf32>
    %80 = arith.addf %79, %78 : vector<16x128xf32>
    %81 = arith.mulf %75, %80 : vector<16x128xf32>
    %82 = arith.truncf %81 : vector<16x128xf32> to vector<16x128xbf16>
    %c0_37 = arith.constant 0 : index
    %c0_38 = arith.constant 0 : index
    %83 = vector.load %arg10[%c0_37, %c0_38] : memref<128x32xbf16, #tpu.memory_space<vmem>>, vector<128x32xbf16>
    %cst_39 = arith.constant dense<0.000000e+00> : vector<16x32xf32>
    %84 = tpu.matmul %82, %83, %cst_39 {dimension_numbers = #tpu.dot_dimension_numbers<[1], [0], [0], [1], [0, 0, 1, 1], [], []>} : vector<16x128xbf16>, vector<128x32xbf16>, vector<16x32xf32> -> vector<16x32xf32>
    %85 = arith.addf %0, %73 : vector<16x32xf32>
    %86 = arith.addf %85, %84 : vector<16x32xf32>
    %c0_40 = arith.constant 0 : index
    %c0_41 = arith.constant 0 : index
    %87 = vector.load %arg11[%c0_40, %c0_41] : memref<16x16xf32, #tpu.memory_space<vmem>>, vector<16x16xf32>
    %88 = vector.extract_strided_slice %87 {offsets = [0, 0], sizes = [4, 16], strides = [1, 1]} : vector<16x16xf32> to vector<4x16xf32>
    %cst_42 = arith.constant dense<0.000000e+00> : vector<4x32xf32>
    %89 = tpu.matmul %88, %86, %cst_42 {dimension_numbers = #tpu.dot_dimension_numbers<[1], [0], [0], [1], [0, 0, 1, 1], [], []>} : vector<4x16xf32>, vector<16x32xf32>, vector<4x32xf32> -> vector<4x32xf32>
    %90 = vector.extract_strided_slice %87 {offsets = [4, 0], sizes = [4, 16], strides = [1, 1]} : vector<16x16xf32> to vector<4x16xf32>
    %cst_43 = arith.constant dense<0.000000e+00> : vector<4x32xf32>
    %91 = tpu.matmul %90, %86, %cst_43 {dimension_numbers = #tpu.dot_dimension_numbers<[1], [0], [0], [1], [0, 0, 1, 1], [], []>} : vector<4x16xf32>, vector<16x32xf32>, vector<4x32xf32> -> vector<4x32xf32>
    %92 = vector.extract_strided_slice %87 {offsets = [8, 0], sizes = [4, 16], strides = [1, 1]} : vector<16x16xf32> to vector<4x16xf32>
    %cst_44 = arith.constant dense<0.000000e+00> : vector<4x32xf32>
    %93 = tpu.matmul %92, %86, %cst_44 {dimension_numbers = #tpu.dot_dimension_numbers<[1], [0], [0], [1], [0, 0, 1, 1], [], []>} : vector<4x16xf32>, vector<16x32xf32>, vector<4x32xf32> -> vector<4x32xf32>
    %94 = vector.extract_strided_slice %87 {offsets = [12, 0], sizes = [4, 16], strides = [1, 1]} : vector<16x16xf32> to vector<4x16xf32>
    %cst_45 = arith.constant dense<0.000000e+00> : vector<4x32xf32>
    %95 = tpu.matmul %94, %86, %cst_45 {dimension_numbers = #tpu.dot_dimension_numbers<[1], [0], [0], [1], [0, 0, 1, 1], [], []>} : vector<4x16xf32>, vector<16x32xf32>, vector<4x32xf32> -> vector<4x32xf32>
    %96 = tpu.concatenate %89, %91, %93, %95 in 1 : vector<4x32xf32>, vector<4x32xf32>, vector<4x32xf32>, vector<4x32xf32> -> vector<4x128xf32>
    %c0_46 = arith.constant 0 : index
    %c0_47 = arith.constant 0 : index
    %97 = vector.load %arg12[%c0_46, %c0_47] : memref<4x128xf32, #tpu.memory_space<vmem>>, vector<4x128xf32>
    tpu.vector_store %arg12[%c0_46, %c0_47], %96 {strides = array<i32>} : memref<4x128xf32, #tpu.memory_space<vmem>>, vector<4x128xf32>,
    return
  }
}

</mosaic_0001>

<llo_original>
// kernel: falcon_decoder.1
$region0: #{falcon_decoder.1}
  #allocation0 [shape = 'u32[]', space=smem, size = 0x4, offset = 0x4, fixed_abs, tag = 'smem constant byte address 0x4 - core index']
  #allocation1 [shape = 'u32[144,128]{1,0:T(1,128)}', space=vmem, size = 0x12000, scoped, tag = 'internal scratch']
  %s0 = inlined_call_operand.vmem [shape: f32[16,32], index: 0, kind: input, shape index: {}]
  %s1 = inlined_call_operand.vmem [shape: bf16[32,200], index: 1, kind: input, shape index: {}]
  %s2 = inlined_call_operand.vmem [shape: f32[1,200], index: 2, kind: input, shape index: {}]
  %s3 = inlined_call_operand.vmem [shape: f32[64,64], index: 3, kind: input, shape index: {}]
  %s4 = inlined_call_operand.vmem [shape: f32[16,64], index: 4, kind: input, shape index: {}]
  %s5 = inlined_call_operand.vmem [shape: f32[16,64], index: 5, kind: input, shape index: {}]
  %s6 = inlined_call_operand.vmem [shape: f32[64,16], index: 6, kind: input, shape index: {}]
  %s7 = inlined_call_operand.vmem [shape: f32[64,32], index: 7, kind: input, shape index: {}]
  %s8 = inlined_call_operand.vmem [shape: f32[64,16], index: 8, kind: input, shape index: {}]
  %s9 = inlined_call_operand.vmem [shape: bf16[8,128], index: 9, kind: input, shape index: {}]
  %s10 = inlined_call_operand.vmem [shape: bf16[128,32], index: 10, kind: input, shape index: {}]
  %s11 = inlined_call_operand.vmem [shape: f32[16,16], index: 11, kind: input, shape index: {}]
  %s12 = inlined_call_operand.vmem [shape: f32[4,128], index: 12, kind: output, shape index: {}]
  %s13 = sld [smem:[#allocation0]]
  $region58: #{falcon_decoder.1} parent=0
    _
  %s15 = ssub.s32 1, %s13
  %s16 = scalar_select 0, %s15, %s13
  // Predicated region
  $region2: #{falcon_decoder.1} parent=0 // pred_check
    _
  $region3: #{falcon_decoder.1} parent=0 // pred_check_branch
    %18 = sbr.rel (0) target = $region5
  $region4: #{falcon_decoder.1} parent=0 // pred_region
    _
  $region5: #{falcon_decoder.1} parent=0 // pred_fallthru
    _
  // Predicated region
  $region6: #{falcon_decoder.1} parent=0 // pred_check
    _
  $region7: #{falcon_decoder.1} parent=0 // pred_check_branch
    %20 = sbr.rel (0) target = $region9
  $region8: #{falcon_decoder.1} parent=0 // pred_region
    _
  $region9: #{falcon_decoder.1} parent=0 // pred_fallthru
    _
  // Predicated region
  $region10: #{falcon_decoder.1} parent=0 // pred_check
    _
  $region11: #{falcon_decoder.1} parent=0 // pred_check_branch
    %22 = sbr.rel (0) target = $region13
  $region12: #{falcon_decoder.1} parent=0 // pred_region
    _
  $region13: #{falcon_decoder.1} parent=0 // pred_fallthru
    _
  // Predicated region
  $region14: #{falcon_decoder.1} parent=0 // pred_check
    _
  $region15: #{falcon_decoder.1} parent=0 // pred_check_branch
    %24 = sbr.rel (0) target = $region17
  $region16: #{falcon_decoder.1} parent=0 // pred_region
    _
  $region17: #{falcon_decoder.1} parent=0 // pred_fallthru
    _
  // Predicated region
  $region18: #{falcon_decoder.1} parent=0 // pred_check
    _
  $region19: #{falcon_decoder.1} parent=0 // pred_check_branch
    %26 = sbr.rel (0) target = $region21
  $region20: #{falcon_decoder.1} parent=0 // pred_region
    _
  $region21: #{falcon_decoder.1} parent=0 // pred_fallthru
    _
  // Predicated region
  $region22: #{falcon_decoder.1} parent=0 // pred_check
    _
  $region23: #{falcon_decoder.1} parent=0 // pred_check_branch
    %28 = sbr.rel (0) target = $region25
  $region24: #{falcon_decoder.1} parent=0 // pred_region
    _
  $region25: #{falcon_decoder.1} parent=0 // pred_fallthru
    _
  // Predicated region
  $region26: #{falcon_decoder.1} parent=0 // pred_check
    _
  $region27: #{falcon_decoder.1} parent=0 // pred_check_branch
    %30 = sbr.rel (0) target = $region29
  $region28: #{falcon_decoder.1} parent=0 // pred_region
    _
  $region29: #{falcon_decoder.1} parent=0 // pred_fallthru
    _
  // Predicated region
  $region30: #{falcon_decoder.1} parent=0 // pred_check
    _
  $region31: #{falcon_decoder.1} parent=0 // pred_check_branch
    %32 = sbr.rel (0) target = $region33
  $region32: #{falcon_decoder.1} parent=0 // pred_region
    _
  $region33: #{falcon_decoder.1} parent=0 // pred_fallthru
    _
  // Predicated region
  $region34: #{falcon_decoder.1} parent=0 // pred_check
    _
  $region35: #{falcon_decoder.1} parent=0 // pred_check_branch
    %34 = sbr.rel (0) target = $region37
  $region36: #{falcon_decoder.1} parent=0 // pred_region
    _
  $region37: #{falcon_decoder.1} parent=0 // pred_fallthru
    _
  // Predicated region
  $region38: #{falcon_decoder.1} parent=0 // pred_check
    _
  $region39: #{falcon_decoder.1} parent=0 // pred_check_branch
    %36 = sbr.rel (0) target = $region41
  $region40: #{falcon_decoder.1} parent=0 // pred_region
    _
  $region41: #{falcon_decoder.1} parent=0 // pred_fallthru
    _
  // Predicated region
  $region42: #{falcon_decoder.1} parent=0 // pred_check
    _
  $region43: #{falcon_decoder.1} parent=0 // pred_check_branch
    %38 = sbr.rel (0) target = $region45
  $region44: #{falcon_decoder.1} parent=0 // pred_region
    _
  $region45: #{falcon_decoder.1} parent=0 // pred_fallthru
    _
  // Predicated region
  $region46: #{falcon_decoder.1} parent=0 // pred_check
    _
  $region47: #{falcon_decoder.1} parent=0 // pred_check_branch
    %40 = sbr.rel (0) target = $region49
  $region48: #{falcon_decoder.1} parent=0 // pred_region
    _
  $region49: #{falcon_decoder.1} parent=0 // pred_fallthru
    _
  %v42 = vld [vmem:[%s0] sm:$0xff]
  %v43 = vld [vmem:[%s0 + $0x8] sm:$0xff]
  %vm44 = vcmask 261120
  %v45 = vsel %vm44, %v42, 0.0
  %46 = vadd.xlane.f32.xlu0 %v45
  %v47 = vpop.xlane.xlu0 %46
  %v48 = vsel %vm44, %v43, 0.0
  %49 = vadd.xlane.f32.xlu0 %v48
  %v50 = vpop.xlane.xlu0 %49
  %v51 = vrcp.pop 32.0
  %v52 = vmul.f32 %v47, %v51
  %v53 = vmul.f32 %v50, %v51
  %v54 = vsub.f32 %v42, %v52
  %v55 = vsub.f32 %v43, %v53
  %v56 = vmul.f32 %v54, %v54
  %v57 = vmul.f32 %v55, %v55
  %v58 = vsel %vm44, %v56, 0.0
  %59 = vadd.xlane.f32.xlu0 %v58
  %v60 = vpop.xlane.xlu0 %59
  %v61 = vsel %vm44, %v57, 0.0
  %62 = vadd.xlane.f32.xlu0 %v61
  %v63 = vpop.xlane.xlu0 %62
  %v64 = vmul.f32 %v60, %v51
  %v65 = vmul.f32 %v63, %v51
  %v66 = vadd.f32 %v64, 1e-05
  %v67 = vadd.f32 %v65, 1e-05
  %v68 = vrsqrt.pop %v66
  %v69 = vrsqrt.pop %v67
  %v70 = vmul.f32 %v54, %v68
  %v71 = vmul.f32 %v55, %v69
  %v72 = vpack.c.bf16 %v71, %v70
  %v73 = vld [vmem:[%s1] sm:$0xff]
  %v74 = vld [vmem:[%s1 + $0x8] sm:$0xff]
  %v75 = vld [vmem:[%s1 + $0x10] sm:$0xff]
  %v76 = vld [vmem:[%s1 + $0x18] sm:$0xff]
  %v77 = vld [vmem:[%s2] sm:$0x3]
  %v79 = vlaneseq
  %v80 = vshrl.u32 %v79, 7
  %v81 = vsub.s32 0, %v80
  %v82 = vrot.slane %v77, %v81
  %v83 = vlaneseq
  %v84 = vshrl.u32 %v83, 7
  %v85 = vsub.s32 1, %v84
  %v86 = vrot.slane %v77, %v85
  %v93 = vunpack.c.l.b16 %v73
  %v94 = vunpack.c.h.b16 %v73
  %v95 = vunpack.c.l.b16 %v74
  %v96 = vunpack.c.h.b16 %v74
  %v97 = vunpack.c.l.b16 %v75
  %v98 = vunpack.c.h.b16 %v75
  %v99 = vunpack.c.l.b16 %v76
  %v100 = vunpack.c.h.b16 %v76
  %v101 = vpack.c.b16 %v95, %v93
  %v102 = vpack.c.b16 %v96, %v94
  %v103 = vpack.c.b16 %v99, %v97
  %v104 = vpack.c.b16 %v100, %v98
  %v110 = vsel %vm44, %v72, 0
  %112 = vmatprep.subr.bf16.mxu0 %v102
  %113 = vmatpush1.bf16.msra.mxu0 %v101
  %114 = vmatprep.subr.bf16.mxu0 %v104
  %115 = vmatpush1.bf16.msra.mxu0 %v103
  %116 = vmatprep.subr.bf16.mxu0 0
  %117 = vmatpush1.bf16.msra.mxu0 0
  %118 = vmatprep.subr.bf16.mxu0 0
  %119 = vmatpush1.bf16.msra.mxu0 0
  %120 = vmatprep.subr.bf16.mxu0 0
  %121 = vmatpush1.bf16.msra.mxu0 0
  %122 = vmatprep.subr.bf16.mxu0 0
  %123 = vmatpush1.bf16.msra.mxu0 0
  %124 = vmatprep.subr.bf16.mxu0 0
  %125 = vmatpush1.bf16.msra.mxu0 0
  %126 = vmatprep.subr.bf16.mxu0 0
  %127 = vmatpush1.bf16.msra.mxu0 0
  %128 = vmatprep.subr.bf16.mxu0 0
  %129 = vmatpush1.bf16.msra.mxu0 0
  %130 = vmatprep.subr.bf16.mxu0 0
  %131 = vmatpush1.bf16.msra.mxu0 0
  %132 = vmatprep.subr.bf16.mxu0 0
  %133 = vmatpush1.bf16.msra.mxu0 0
  %134 = vmatprep.subr.bf16.mxu0 0
  %135 = vmatpush1.bf16.msra.mxu0 0
  %136 = vmatprep.subr.bf16.mxu0 0
  %137 = vmatpush1.bf16.msra.mxu0 0
  %138 = vmatprep.subr.bf16.mxu0 0
  %139 = vmatpush1.bf16.msra.mxu0 0
  %140 = vmatprep.subr.bf16.mxu0 0
  %141 = vmatpush1.bf16.msra.mxu0 0
  %142 = vmatprep.subr.bf16.mxu0 0
  %143 = vmatpush1.bf16.msra.mxu0 0
  %144 = vmatprep.mubr.bf16.mxu0 0
  %145 = vmatmul.mubr.bf16.gmra.mrb[0].mxu0 %v110
  %v146 = vpop.f32.mrb[0].mxu0
  %v147 = vadd.f32 %v82, %v146
  %v148 = vpop.f32.mrb[0].mxu0
  %v149 = vadd.f32 %v86, %v148
  %v150 = vpop.f32.mrb[0].mxu0
  %v151 = vadd.f32 %v82, %v150
  %v152 = vpop.f32.mrb[0].mxu0
  %v153 = vadd.f32 %v86, %v152
  %154 = vdwg.mxu0
  %v155 = vld [vmem:[%s4] sm:$0xff]
  %v156 = vld [vmem:[%s4 + $0x8] sm:$0xff]
  %v157 = vmul.f32 %v149, %v155
  %v158 = vmul.f32 %v153, %v156
  %v159 = vld [vmem:[%s3] sm:$0xff]
  %v160 = vld [vmem:[%s3 + $0x8] sm:$0xff]
  %v161 = vld [vmem:[%s3 + $0x10] sm:$0xff]
  %v162 = vld [vmem:[%s3 + $0x18] sm:$0xff]
  %v163 = vld [vmem:[%s3 + $0x20] sm:$0xff]
  %v164 = vld [vmem:[%s3 + $0x28] sm:$0xff]
  %v165 = vld [vmem:[%s3 + $0x30] sm:$0xff]
  %v166 = vld [vmem:[%s3 + $0x38] sm:$0xff]
  %vm167 = vcmask 523264
  %v169 = vsel %vm167, %v149, 0
  %v172 = vsel %vm167, %v153, 0
  %174 = vmatprep.subr.mxu0 0.0
  %175 = vmatpush1.msra.mxu0 %v159
  %176 = vmatprep.subr.mxu0 0.0
  %177 = vmatpush1.msra.mxu0 %v160
  %178 = vmatprep.subr.mxu0 0.0
  %179 = vmatpush1.msra.mxu0 %v161
  %180 = vmatprep.subr.mxu0 0.0
  %181 = vmatpush1.msra.mxu0 %v162
  %182 = vmatprep.subr.mxu0 0.0
  %183 = vmatpush1.msra.mxu0 %v163
  %184 = vmatprep.subr.mxu0 0.0
  %185 = vmatpush1.msra.mxu0 %v164
  %186 = vmatprep.subr.mxu0 0.0
  %187 = vmatpush1.msra.mxu0 %v165
  %188 = vmatprep.subr.mxu0 0.0
  %189 = vmatpush1.msra.mxu0 %v166
  %190 = vmatprep.subr.mxu0 0.0
  %191 = vmatpush1.msra.mxu0 0.0
  %192 = vmatprep.subr.mxu0 0.0
  %193 = vmatpush1.msra.mxu0 0.0
  %194 = vmatprep.subr.mxu0 0.0
  %195 = vmatpush1.msra.mxu0 0.0
  %196 = vmatprep.subr.mxu0 0.0
  %197 = vmatpush1.msra.mxu0 0.0
  %198 = vmatprep.subr.mxu0 0.0
  %199 = vmatpush1.msra.mxu0 0.0
  %200 = vmatprep.subr.mxu0 0.0
  %201 = vmatpush1.msra.mxu0 0.0
  %202 = vmatprep.subr.mxu0 0.0
  %203 = vmatpush1.msra.mxu0 0.0
  %204 = vmatprep.subr.mxu0 0.0
  %205 = vmatpush1.msra.mxu0 0.0
  %206 = vmatprep.subr.mxu0 0.0
  %207 = vmatpush1.msra.mxu0 0.0
  %208 = vmatprep.subr.mxu0 0.0
  %209 = vmatpush1.msra.mxu0 0.0
  %210 = vmatprep.subr.mxu0 0.0
  %211 = vmatpush1.msra.mxu0 0.0
  %212 = vmatprep.subr.mxu0 0.0
  %213 = vmatpush1.msra.mxu0 0.0
  %214 = vmatprep.subr.mxu0 0.0
  %215 = vmatpush1.msra.mxu0 0.0
  %216 = vmatprep.subr.mxu0 0.0
  %217 = vmatpush1.msra.mxu0 0.0
  %218 = vmatprep.subr.mxu0 0.0
  %219 = vmatpush1.msra.mxu0 0.0
  %220 = vmatprep.subr.mxu0 0.0
  %221 = vmatpush1.msra.mxu0 0.0
  %222 = vmatprep.subr.mxu0 0.0
  %223 = vmatpush1.msra.mxu0 0.0
  %224 = vmatprep.subr.mxu0 0.0
  %225 = vmatpush1.msra.mxu0 0.0
  %226 = vmatprep.subr.mxu0 0.0
  %227 = vmatpush1.msra.mxu0 0.0
  %228 = vmatprep.subr.mxu0 0.0
  %229 = vmatpush1.msra.mxu0 0.0
  %230 = vmatprep.subr.mxu0 0.0
  %231 = vmatpush1.msra.mxu0 0.0
  %232 = vmatprep.subr.mxu0 0.0
  %233 = vmatpush1.msra.mxu0 0.0
  %234 = vmatprep.subr.mxu0 0.0
  %235 = vmatpush1.msra.mxu0 0.0
  %236 = vmatprep.subr.mxu0 0.0
  %237 = vmatpush1.msra.mxu0 0.0
  %238 = vmatprep.mubr.f32.mxu0 0.0
  %239 = vmatmul.mubr.f32.gmra.mrb[0].mxu0 %v169
  %v240 = vpop.f32.mrb[0].mxu0
  %v241 = vadd.f32 0.0, %v240
  %v242 = vpop.f32.mrb[0].mxu0
  %243 = vmatprep.mubr.f32.mxu0 0.0
  %244 = vmatmul.mubr.f32.gmra.mrb[0].mxu0 %v172
  %v245 = vpop.f32.mrb[0].mxu0
  %v246 = vadd.f32 0.0, %v245
  %v247 = vpop.f32.mrb[0].mxu0
  %248 = vdwg.mxu0
  %v249 = vld [vmem:[%s5] sm:$0xff]
  %v250 = vld [vmem:[%s5 + $0x8] sm:$0xff]
  %v251 = vmul.f32 %v241, %v249
  %v252 = vmul.f32 %v246, %v250
  %v253 = vadd.f32 %v157, %v251
  %v254 = vadd.f32 %v158, %v252
  %v255 = vld [vmem:[%s6] sm:$0xff]
  %v256 = vld [vmem:[%s6 + $0x8] sm:$0xff]
  %v257 = vld [vmem:[%s6 + $0x10] sm:$0xff]
  %v258 = vld [vmem:[%s6 + $0x18] sm:$0xff]
  %v259 = vld [vmem:[%s6 + $0x20] sm:$0xff]
  %v260 = vld [vmem:[%s6 + $0x28] sm:$0xff]
  %v261 = vld [vmem:[%s6 + $0x30] sm:$0xff]
  %v262 = vld [vmem:[%s6 + $0x38] sm:$0xff]
  %vm263 = vcmask 130048
  %v265 = vsel %vm263, %v255, 0
  %v268 = vsel %vm263, %v256, 0
  %v271 = vsel %vm263, %v257, 0
  %v274 = vsel %vm263, %v258, 0
  %v277 = vsel %vm263, %v259, 0
  %v280 = vsel %vm263, %v260, 0
  %v283 = vsel %vm263, %v261, 0
  %v286 = vsel %vm263, %v262, 0
  %288 = vmatprep.subr.mxu0 0.0
  %289 = vmatpush1.msra.mxu0 %v253
  %290 = vmatprep.subr.mxu0 0.0
  %291 = vmatpush1.msra.mxu0 %v254
  %292 = vmatprep.subr.mxu0 0.0
  %293 = vmatpush1.msra.mxu0 0.0
  %294 = vmatprep.subr.mxu0 0.0
  %295 = vmatpush1.msra.mxu0 0.0
  %296 = vmatprep.subr.mxu0 0.0
  %297 = vmatpush1.msra.mxu0 0.0
  %298 = vmatprep.subr.mxu0 0.0
  %299 = vmatpush1.msra.mxu0 0.0
  %300 = vmatprep.subr.mxu0 0.0
  %301 = vmatpush1.msra.mxu0 0.0
  %302 = vmatprep.subr.mxu0 0.0
  %303 = vmatpush1.msra.mxu0 0.0
  %304 = vmatprep.subr.mxu0 0.0
  %305 = vmatpush1.msra.mxu0 0.0
  %306 = vmatprep.subr.mxu0 0.0
  %307 = vmatpush1.msra.mxu0 0.0
  %308 = vmatprep.subr.mxu0 0.0
  %309 = vmatpush1.msra.mxu0 0.0
  %310 = vmatprep.subr.mxu0 0.0
  %311 = vmatpush1.msra.mxu0 0.0
  %312 = vmatprep.subr.mxu0 0.0
  %313 = vmatpush1.msra.mxu0 0.0
  %314 = vmatprep.subr.mxu0 0.0
  %315 = vmatpush1.msra.mxu0 0.0
  %316 = vmatprep.subr.mxu0 0.0
  %317 = vmatpush1.msra.mxu0 0.0
  %318 = vmatprep.subr.mxu0 0.0
  %319 = vmatpush1.msra.mxu0 0.0
  %320 = vmatprep.subr.mxu0 0.0
  %321 = vmatpush1.msra.mxu0 0.0
  %322 = vmatprep.subr.mxu0 0.0
  %323 = vmatpush1.msra.mxu0 0.0
  %324 = vmatprep.subr.mxu0 0.0
  %325 = vmatpush1.msra.mxu0 0.0
  %326 = vmatprep.subr.mxu0 0.0
  %327 = vmatpush1.msra.mxu0 0.0
  %328 = vmatprep.subr.mxu0 0.0
  %329 = vmatpush1.msra.mxu0 0.0
  %330 = vmatprep.subr.mxu0 0.0
  %331 = vmatpush1.msra.mxu0 0.0
  %332 = vmatprep.subr.mxu0 0.0
  %333 = vmatpush1.msra.mxu0 0.0
  %334 = vmatprep.subr.mxu0 0.0
  %335 = vmatpush1.msra.mxu0 0.0
  %336 = vmatprep.subr.mxu0 0.0
  %337 = vmatpush1.msra.mxu0 0.0
  %338 = vmatprep.subr.mxu0 0.0
  %339 = vmatpush1.msra.mxu0 0.0
  %340 = vmatprep.subr.mxu0 0.0
  %341 = vmatpush1.msra.mxu0 0.0
  %342 = vmatprep.subr.mxu0 0.0
  %343 = vmatpush1.msra.mxu0 0.0
  %344 = vmatprep.subr.mxu0 0.0
  %345 = vmatpush1.msra.mxu0 0.0
  %346 = vmatprep.subr.mxu0 0.0
  %347 = vmatpush1.msra.mxu0 0.0
  %348 = vmatprep.subr.mxu0 0.0
  %349 = vmatpush1.msra.mxu0 0.0
  %350 = vmatprep.subr.mxu0 0.0
  %351 = vmatpush1.msra.mxu0 0.0
  %352 = vmatprep.mubr.f32.mxu0 0.0
  %353 = vmatmul.mubr.f32.gmra.mrb[0].mxu0 %v265
  %v354 = vpop.f32.mrb[0].mxu0
  %v355 = vadd.f32 0.0, %v354
  %v356 = vpop.f32.mrb[0].mxu0
  %357 = vmatprep.mubr.f32.mxu0 0.0
  %358 = vmatmul.mubr.f32.gmra.mrb[0].mxu0 %v268
  %v359 = vpop.f32.mrb[0].mxu0
  %v360 = vadd.f32 0.0, %v359
  %v361 = vpop.f32.mrb[0].mxu0
  %362 = vmatprep.mubr.f32.mxu0 0.0
  %363 = vmatmul.mubr.f32.gmra.mrb[0].mxu0 %v271
  %v364 = vpop.f32.mrb[0].mxu0
  %v365 = vadd.f32 0.0, %v364
  %v366 = vpop.f32.mrb[0].mxu0
  %367 = vmatprep.mubr.f32.mxu0 0.0
  %368 = vmatmul.mubr.f32.gmra.mrb[0].mxu0 %v274
  %v369 = vpop.f32.mrb[0].mxu0
  %v370 = vadd.f32 0.0, %v369
  %v371 = vpop.f32.mrb[0].mxu0
  %372 = vmatprep.mubr.f32.mxu0 0.0
  %373 = vmatmul.mubr.f32.gmra.mrb[0].mxu0 %v277
  %v374 = vpop.f32.mrb[0].mxu0
  %v375 = vadd.f32 0.0, %v374
  %v376 = vpop.f32.mrb[0].mxu0
  %377 = vmatprep.mubr.f32.mxu0 0.0
  %378 = vmatmul.mubr.f32.gmra.mrb[0].mxu0 %v280
  %v379 = vpop.f32.mrb[0].mxu0
  %v380 = vadd.f32 0.0, %v379
  %v381 = vpop.f32.mrb[0].mxu0
  %382 = vmatprep.mubr.f32.mxu0 0.0
  %383 = vmatmul.mubr.f32.gmra.mrb[0].mxu0 %v283
  %v384 = vpop.f32.mrb[0].mxu0
  %v385 = vadd.f32 0.0, %v384
  %v386 = vpop.f32.mrb[0].mxu0
  %387 = vmatprep.mubr.f32.mxu0 0.0
  %388 = vmatmul.mubr.f32.gmra.mrb[0].mxu0 %v286
  %v389 = vpop.f32.mrb[0].mxu0
  %v390 = vadd.f32 0.0, %v389
  %v391 = vpop.f32.mrb[0].mxu0
  %392 = vdwg.mxu0
  %v393 = vld [vmem:[%s7] sm:$0xff]
  %v394 = vld [vmem:[%s7 + $0x8] sm:$0xff]
  %v395 = vld [vmem:[%s7 + $0x10] sm:$0xff]
  %v396 = vld [vmem:[%s7 + $0x18] sm:$0xff]
  %v397 = vld [vmem:[%s7 + $0x20] sm:$0xff]
  %v398 = vld [vmem:[%s7 + $0x28] sm:$0xff]
  %v399 = vld [vmem:[%s7 + $0x30] sm:$0xff]
  %v400 = vld [vmem:[%s7 + $0x38] sm:$0xff]
  %v401 = vmul.f32 %v355, %v393
  %v402 = vmul.f32 %v360, %v394
  %v403 = vmul.f32 %v365, %v395
  %v404 = vmul.f32 %v370, %v396
  %v405 = vmul.f32 %v375, %v397
  %v406 = vmul.f32 %v380, %v398
  %v407 = vmul.f32 %v385, %v399
  %v408 = vmul.f32 %v390, %v400
  %v409 = vpack.c.bf16 %v402, %v401
  %v410 = vpack.c.bf16 %v404, %v403
  %v411 = vpack.c.bf16 %v406, %v405
  %v412 = vpack.c.bf16 %v408, %v407
  %v413 = vpack.c.bf16 %v254, %v253
  %v414 = vld [vmem:[%s8] sm:$0xff]
  %v415 = vld [vmem:[%s8 + $0x8] sm:$0xff]
  %v416 = vld [vmem:[%s8 + $0x10] sm:$0xff]
  %v417 = vld [vmem:[%s8 + $0x18] sm:$0xff]
  %v418 = vld [vmem:[%s8 + $0x20] sm:$0xff]
  %v419 = vld [vmem:[%s8 + $0x28] sm:$0xff]
  %v420 = vld [vmem:[%s8 + $0x30] sm:$0xff]
  %v421 = vld [vmem:[%s8 + $0x38] sm:$0xff]
  %423 = vrot.lane.b32.xlu0 %v413, 96
  %v424 = vpop.permute.xlu0 %423
  %v426 = vsel %vm44, %v409, 0
  %v429 = vsel %vm44, %v410, 0
  %v432 = vsel %vm44, %v411, 0
  %v435 = vsel %vm44, %v412, 0
  %v438 = vsel %vm44, %v424, 0
  %440 = vmatprep.subr.bf16.mxu0 0
  %441 = vmatpush1.bf16.xpose.msra.mxu0 %v438
  %442 = vmatprep.subr.bf16.mxu0 0
  %443 = vmatpush1.bf16.xpose.msra.mxu0 0
  %444 = vmatprep.subr.bf16.mxu0 0
  %445 = vmatpush1.bf16.xpose.msra.mxu0 0
  %446 = vmatprep.subr.bf16.mxu0 0
  %447 = vmatpush1.bf16.xpose.msra.mxu0 0
  %448 = vmatprep.subr.bf16.mxu0 0
  %449 = vmatpush1.bf16.xpose.msra.mxu0 0
  %450 = vmatprep.subr.bf16.mxu0 0
  %451 = vmatpush1.bf16.xpose.msra.mxu0 0
  %452 = vmatprep.subr.bf16.mxu0 0
  %453 = vmatpush1.bf16.xpose.msra.mxu0 0
  %454 = vmatprep.subr.bf16.mxu0 0
  %455 = vmatpush1.bf16.xpose.msra.mxu0 0
  %456 = vmatprep.subr.bf16.mxu0 0
  %457 = vmatpush1.bf16.xpose.msra.mxu0 0
  %458 = vmatprep.subr.bf16.mxu0 0
  %459 = vmatpush1.bf16.xpose.msra.mxu0 0
  %460 = vmatprep.subr.bf16.mxu0 0
  %461 = vmatpush1.bf16.xpose.msra.mxu0 0
  %462 = vmatprep.subr.bf16.mxu0 0
  %463 = vmatpush1.bf16.xpose.msra.mxu0 0
  %464 = vmatprep.subr.bf16.mxu0 0
  %465 = vmatpush1.bf16.xpose.msra.mxu0 0
  %466 = vmatprep.subr.bf16.mxu0 0
  %467 = vmatpush1.bf16.xpose.msra.mxu0 0
  %468 = vmatprep.subr.bf16.mxu0 0
  %469 = vmatpush1.bf16.xpose.msra.mxu0 0
  %470 = vmatprep.subr.bf16.mxu0 0
  %471 = vmatpush1.bf16.xpose.msra.mxu0 0
  %472 = vmatprep.mubr.bf16.mxu0 0
  %473 = vmatmul.mubr.bf16.gmra.mrb[0].mxu0 %v426
  %v474 = vpop.f32.mrb[0].mxu0
  %v475 = vadd.f32 %v414, %v474
  %v476 = vpop.f32.mrb[0].mxu0
  %v477 = vpop.f32.mrb[0].mxu0
  %v478 = vadd.f32 %v415, %v477
  %v479 = vpop.f32.mrb[0].mxu0
  %480 = vmatprep.mubr.bf16.mxu0 0
  %481 = vmatmul.mubr.bf16.gmra.mrb[0].mxu0 %v429
  %v482 = vpop.f32.mrb[0].mxu0
  %v483 = vadd.f32 %v416, %v482
  %v484 = vpop.f32.mrb[0].mxu0
  %v485 = vpop.f32.mrb[0].mxu0
  %v486 = vadd.f32 %v417, %v485
  %v487 = vpop.f32.mrb[0].mxu0
  %488 = vmatprep.mubr.bf16.mxu0 0
  %489 = vmatmul.mubr.bf16.gmra.mrb[0].mxu0 %v432
  %v490 = vpop.f32.mrb[0].mxu0
  %v491 = vadd.f32 %v418, %v490
  %v492 = vpop.f32.mrb[0].mxu0
  %v493 = vpop.f32.mrb[0].mxu0
  %v494 = vadd.f32 %v419, %v493
  %v495 = vpop.f32.mrb[0].mxu0
  %496 = vmatprep.mubr.bf16.mxu0 0
  %497 = vmatmul.mubr.bf16.gmra.mrb[0].mxu0 %v435
  %v498 = vpop.f32.mrb[0].mxu0
  %v499 = vadd.f32 %v420, %v498
  %v500 = vpop.f32.mrb[0].mxu0
  %v501 = vpop.f32.mrb[0].mxu0
  %v502 = vadd.f32 %v421, %v501
  %v503 = vpop.f32.mrb[0].mxu0
  %504 = vdwg.mxu0
  %v505 = vsel %vm263, %v475, -inf
  %506 = vmax.xlane.f32.xlu0 %v505
  %v507 = vpop.xlane.xlu0 %506
  %v508 = vsel %vm263, %v478, -inf
  %509 = vmax.xlane.f32.xlu0 %v508
  %v510 = vpop.xlane.xlu0 %509
  %v511 = vsel %vm263, %v483, -inf
  %512 = vmax.xlane.f32.xlu0 %v511
  %v513 = vpop.xlane.xlu0 %512
  %v514 = vsel %vm263, %v486, -inf
  %515 = vmax.xlane.f32.xlu0 %v514
  %v516 = vpop.xlane.xlu0 %515
  %v517 = vsel %vm263, %v491, -inf
  %518 = vmax.xlane.f32.xlu0 %v517
  %v519 = vpop.xlane.xlu0 %518
  %v520 = vsel %vm263, %v494, -inf
  %521 = vmax.xlane.f32.xlu0 %v520
  %v522 = vpop.xlane.xlu0 %521
  %v523 = vsel %vm263, %v499, -inf
  %524 = vmax.xlane.f32.xlu0 %v523
  %v525 = vpop.xlane.xlu0 %524
  %v526 = vsel %vm263, %v502, -inf
  %527 = vmax.xlane.f32.xlu0 %v526
  %v528 = vpop.xlane.xlu0 %527
  %v529 = vsub.f32 %v475, %v507
  %v530 = vsub.f32 %v478, %v510
  %v531 = vsub.f32 %v483, %v513
  %v532 = vsub.f32 %v486, %v516
  %v533 = vsub.f32 %v491, %v519
  %v534 = vsub.f32 %v494, %v522
  %v535 = vsub.f32 %v499, %v525
  %v536 = vsub.f32 %v502, %v528
  %v537 = vmul.f32 %v529, 1.442695
  %v538 = vpow.pop %v537
  %v539 = vmul.f32 %v530, 1.442695
  %v540 = vpow.pop %v539
  %v541 = vmul.f32 %v531, 1.442695
  %v542 = vpow.pop %v541
  %v543 = vmul.f32 %v532, 1.442695
  %v544 = vpow.pop %v543
  %v545 = vmul.f32 %v533, 1.442695
  %v546 = vpow.pop %v545
  %v547 = vmul.f32 %v534, 1.442695
  %v548 = vpow.pop %v547
  %v549 = vmul.f32 %v535, 1.442695
  %v550 = vpow.pop %v549
  %v551 = vmul.f32 %v536, 1.442695
  %v552 = vpow.pop %v551
  %v553 = vsel %vm263, %v538, 0.0
  %554 = vadd.xlane.f32.xlu0 %v553
  %v555 = vpop.xlane.xlu0 %554
  %v556 = vsel %vm263, %v540, 0.0
  %557 = vadd.xlane.f32.xlu0 %v556
  %v558 = vpop.xlane.xlu0 %557
  %v559 = vsel %vm263, %v542, 0.0
  %560 = vadd.xlane.f32.xlu0 %v559
  %v561 = vpop.xlane.xlu0 %560
  %v562 = vsel %vm263, %v544, 0.0
  %563 = vadd.xlane.f32.xlu0 %v562
  %v564 = vpop.xlane.xlu0 %563
  %v565 = vsel %vm263, %v546, 0.0
  %566 = vadd.xlane.f32.xlu0 %v565
  %v567 = vpop.xlane.xlu0 %566
  %v568 = vsel %vm263, %v548, 0.0
  %569 = vadd.xlane.f32.xlu0 %v568
  %v570 = vpop.xlane.xlu0 %569
  %v571 = vsel %vm263, %v550, 0.0
  %572 = vadd.xlane.f32.xlu0 %v571
  %v573 = vpop.xlane.xlu0 %572
  %v574 = vsel %vm263, %v552, 0.0
  %575 = vadd.xlane.f32.xlu0 %v574
  %v576 = vpop.xlane.xlu0 %575
  %v577 = vrcp.pop %v555
  %v578 = vrcp.pop %v558
  %v579 = vrcp.pop %v561
  %v580 = vrcp.pop %v564
  %v581 = vrcp.pop %v567
  %v582 = vrcp.pop %v570
  %v583 = vrcp.pop %v573
  %v584 = vrcp.pop %v576
  %v585 = vmul.f32 %v538, %v577
  %v586 = vmul.f32 %v540, %v578
  %v587 = vmul.f32 %v542, %v579
  %v588 = vmul.f32 %v544, %v580
  %v589 = vmul.f32 %v546, %v581
  %v590 = vmul.f32 %v548, %v582
  %v591 = vmul.f32 %v550, %v583
  %v592 = vmul.f32 %v552, %v584
  %v593 = vpack.c.bf16 %v586, %v585
  %v594 = vpack.c.bf16 %v588, %v587
  %v595 = vpack.c.bf16 %v590, %v589
  %v596 = vpack.c.bf16 %v592, %v591
  %v597 = vpack.c.bf16 %v153, %v149
  %v598 = vld [vmem:[%s9] sm:$0xf]
  %600 = vrot.lane.b32.xlu0 %v597, 64
  %v601 = vpop.permute.xlu0 %600
  %vm602 = vcmask 64512
  %v604 = vsel %vm602, %v601, 0
  %vm606 = vcmask 1043456
  %v608 = vsel %vm606, %v598, 0
  %610 = vmatprep.subr.bf16.mxu0 0
  %611 = vmatpush1.bf16.msra.mxu0 %v608
  %612 = vmatprep.subr.bf16.mxu0 0
  %613 = vmatpush1.bf16.msra.mxu0 0
  %614 = vmatprep.subr.bf16.mxu0 0
  %615 = vmatpush1.bf16.msra.mxu0 0
  %616 = vmatprep.subr.bf16.mxu0 0
  %617 = vmatpush1.bf16.msra.mxu0 0
  %618 = vmatprep.subr.bf16.mxu0 0
  %619 = vmatpush1.bf16.msra.mxu0 0
  %620 = vmatprep.subr.bf16.mxu0 0
  %621 = vmatpush1.bf16.msra.mxu0 0
  %622 = vmatprep.subr.bf16.mxu0 0
  %623 = vmatpush1.bf16.msra.mxu0 0
  %624 = vmatprep.subr.bf16.mxu0 0
  %625 = vmatpush1.bf16.msra.mxu0 0
  %626 = vmatprep.subr.bf16.mxu0 0
  %627 = vmatpush1.bf16.msra.mxu0 0
  %628 = vmatprep.subr.bf16.mxu0 0
  %629 = vmatpush1.bf16.msra.mxu0 0
  %630 = vmatprep.subr.bf16.mxu0 0
  %631 = vmatpush1.bf16.msra.mxu0 0
  %632 = vmatprep.subr.bf16.mxu0 0
  %633 = vmatpush1.bf16.msra.mxu0 0
  %634 = vmatprep.subr.bf16.mxu0 0
  %635 = vmatpush1.bf16.msra.mxu0 0
  %636 = vmatprep.subr.bf16.mxu0 0
  %637 = vmatpush1.bf16.msra.mxu0 0
  %638 = vmatprep.subr.bf16.mxu0 0
  %639 = vmatpush1.bf16.msra.mxu0 0
  %640 = vmatprep.subr.bf16.mxu0 0
  %641 = vmatpush1.bf16.msra.mxu0 0
  %642 = vmatprep.mubr.bf16.mxu0 0
  %643 = vmatmul.mubr.bf16.gmra.mrb[0].mxu0 %v604
  %v644 = vpop.f32.mrb[0].mxu0
  %v645 = vadd.f32 0.0, %v644
  %v646 = vpop.f32.mrb[0].mxu0
  %v647 = vpop.f32.mrb[0].mxu0
  %v648 = vadd.f32 0.0, %v647
  %v649 = vpop.f32.mrb[0].mxu0
  %650 = vdwg.mxu0
  %v651 = vpack.c.bf16 %v648, %v645
  %653 = vrot.lane.b32.xlu0 %v651, 96
  %v654 = vpop.permute.xlu0 %653
  %v657 = vsel %vm263, %v594, 0
  %659 = vmatprep.subr.bf16.mxu0 0
  %660 = vmatpush1.bf16.msra.mxu0 %v654
  %661 = vmatprep.subr.bf16.mxu0 0
  %662 = vmatpush1.bf16.msra.mxu0 0
  %663 = vmatprep.subr.bf16.mxu0 0
  %664 = vmatpush1.bf16.msra.mxu0 0
  %665 = vmatprep.subr.bf16.mxu0 0
  %666 = vmatpush1.bf16.msra.mxu0 0
  %667 = vmatprep.subr.bf16.mxu0 0
  %668 = vmatpush1.bf16.msra.mxu0 0
  %669 = vmatprep.subr.bf16.mxu0 0
  %670 = vmatpush1.bf16.msra.mxu0 0
  %671 = vmatprep.subr.bf16.mxu0 0
  %672 = vmatpush1.bf16.msra.mxu0 0
  %673 = vmatprep.subr.bf16.mxu0 0
  %674 = vmatpush1.bf16.msra.mxu0 0
  %675 = vmatprep.subr.bf16.mxu0 0
  %676 = vmatpush1.bf16.msra.mxu0 0
  %677 = vmatprep.subr.bf16.mxu0 0
  %678 = vmatpush1.bf16.msra.mxu0 0
  %679 = vmatprep.subr.bf16.mxu0 0
  %680 = vmatpush1.bf16.msra.mxu0 0
  %681 = vmatprep.subr.bf16.mxu0 0
  %682 = vmatpush1.bf16.msra.mxu0 0
  %683 = vmatprep.subr.bf16.mxu0 0
  %684 = vmatpush1.bf16.msra.mxu0 0
  %685 = vmatprep.subr.bf16.mxu0 0
  %686 = vmatpush1.bf16.msra.mxu0 0
  %687 = vmatprep.subr.bf16.mxu0 0
  %688 = vmatpush1.bf16.msra.mxu0 0
  %689 = vmatprep.subr.bf16.mxu0 0
  %690 = vmatpush1.bf16.msra.mxu0 0
  %691 = vmatprep.mubr.bf16.mxu0 0
  %692 = vmatmul.mubr.bf16.gmra.mrb[0].mxu0 %v657
  %v693 = vpop.f32.mrb[0].mxu0
  %v694 = vadd.f32 0.0, %v693
  %v695 = vpop.f32.mrb[0].mxu0
  %v696 = vpop.f32.mrb[0].mxu0
  %v697 = vadd.f32 0.0, %v696
  %v698 = vpop.f32.mrb[0].mxu0
  %699 = vdwg.mxu0
  %v701 = vsel %vm263, %v593, 0
  %703 = vmatprep.subr.bf16.mxu0 0
  %704 = vmatpush1.bf16.msra.mxu0 %v651
  %705 = vmatprep.subr.bf16.mxu0 0
  %706 = vmatpush1.bf16.msra.mxu0 0
  %707 = vmatprep.subr.bf16.mxu0 0
  %708 = vmatpush1.bf16.msra.mxu0 0
  %709 = vmatprep.subr.bf16.mxu0 0
  %710 = vmatpush1.bf16.msra.mxu0 0
  %711 = vmatprep.subr.bf16.mxu0 0
  %712 = vmatpush1.bf16.msra.mxu0 0
  %713 = vmatprep.subr.bf16.mxu0 0
  %714 = vmatpush1.bf16.msra.mxu0 0
  %715 = vmatprep.subr.bf16.mxu0 0
  %716 = vmatpush1.bf16.msra.mxu0 0
  %717 = vmatprep.subr.bf16.mxu0 0
  %718 = vmatpush1.bf16.msra.mxu0 0
  %719 = vmatprep.subr.bf16.mxu0 0
  %720 = vmatpush1.bf16.msra.mxu0 0
  %721 = vmatprep.subr.bf16.mxu0 0
  %722 = vmatpush1.bf16.msra.mxu0 0
  %723 = vmatprep.subr.bf16.mxu0 0
  %724 = vmatpush1.bf16.msra.mxu0 0
  %725 = vmatprep.subr.bf16.mxu0 0
  %726 = vmatpush1.bf16.msra.mxu0 0
  %727 = vmatprep.subr.bf16.mxu0 0
  %728 = vmatpush1.bf16.msra.mxu0 0
  %729 = vmatprep.subr.bf16.mxu0 0
  %730 = vmatpush1.bf16.msra.mxu0 0
  %731 = vmatprep.subr.bf16.mxu0 0
  %732 = vmatpush1.bf16.msra.mxu0 0
  %733 = vmatprep.subr.bf16.mxu0 0
  %734 = vmatpush1.bf16.msra.mxu0 0
  %735 = vmatprep.mubr.bf16.mxu0 0
  %736 = vmatmul.mubr.bf16.gmra.mrb[0].mxu0 %v701
  %v737 = vpop.f32.mrb[0].mxu0
  %v738 = vadd.f32 %v694, %v737
  %v739 = vpop.f32.mrb[0].mxu0
  %v740 = vpop.f32.mrb[0].mxu0
  %v741 = vadd.f32 %v697, %v740
  %v742 = vpop.f32.mrb[0].mxu0
  %743 = vdwg.mxu0
  %744 = vrot.lane.b32.xlu0 %v651, 64
  %v745 = vpop.permute.xlu0 %744
  %v748 = vsel %vm263, %v595, 0
  %750 = vmatprep.subr.bf16.mxu0 0
  %751 = vmatpush1.bf16.msra.mxu0 %v745
  %752 = vmatprep.subr.bf16.mxu0 0
  %753 = vmatpush1.bf16.msra.mxu0 0
  %754 = vmatprep.subr.bf16.mxu0 0
  %755 = vmatpush1.bf16.msra.mxu0 0
  %756 = vmatprep.subr.bf16.mxu0 0
  %757 = vmatpush1.bf16.msra.mxu0 0
  %758 = vmatprep.subr.bf16.mxu0 0
  %759 = vmatpush1.bf16.msra.mxu0 0
  %760 = vmatprep.subr.bf16.mxu0 0
  %761 = vmatpush1.bf16.msra.mxu0 0
  %762 = vmatprep.subr.bf16.mxu0 0
  %763 = vmatpush1.bf16.msra.mxu0 0
  %764 = vmatprep.subr.bf16.mxu0 0
  %765 = vmatpush1.bf16.msra.mxu0 0
  %766 = vmatprep.subr.bf16.mxu0 0
  %767 = vmatpush1.bf16.msra.mxu0 0
  %768 = vmatprep.subr.bf16.mxu0 0
  %769 = vmatpush1.bf16.msra.mxu0 0
  %770 = vmatprep.subr.bf16.mxu0 0
  %771 = vmatpush1.bf16.msra.mxu0 0
  %772 = vmatprep.subr.bf16.mxu0 0
  %773 = vmatpush1.bf16.msra.mxu0 0
  %774 = vmatprep.subr.bf16.mxu0 0
  %775 = vmatpush1.bf16.msra.mxu0 0
  %776 = vmatprep.subr.bf16.mxu0 0
  %777 = vmatpush1.bf16.msra.mxu0 0
  %778 = vmatprep.subr.bf16.mxu0 0
  %779 = vmatpush1.bf16.msra.mxu0 0
  %780 = vmatprep.subr.bf16.mxu0 0
  %781 = vmatpush1.bf16.msra.mxu0 0
  %782 = vmatprep.mubr.bf16.mxu0 0
  %783 = vmatmul.mubr.bf16.gmra.mrb[0].mxu0 %v748
  %v784 = vpop.f32.mrb[0].mxu0
  %v785 = vadd.f32 0.0, %v784
  %v786 = vpop.f32.mrb[0].mxu0
  %v787 = vpop.f32.mrb[0].mxu0
  %v788 = vadd.f32 0.0, %v787
  %v789 = vpop.f32.mrb[0].mxu0
  %790 = vdwg.mxu0
  %v791 = vadd.f32 %v738, %v785
  %v792 = vadd.f32 %v741, %v788
  %793 = vrot.lane.b32.xlu0 %v651, 32
  %v794 = vpop.permute.xlu0 %793
  %v797 = vsel %vm263, %v596, 0
  %799 = vmatprep.subr.bf16.mxu0 0
  %800 = vmatpush1.bf16.msra.mxu0 %v794
  %801 = vmatprep.subr.bf16.mxu0 0
  %802 = vmatpush1.bf16.msra.mxu0 0
  %803 = vmatprep.subr.bf16.mxu0 0
  %804 = vmatpush1.bf16.msra.mxu0 0
  %805 = vmatprep.subr.bf16.mxu0 0
  %806 = vmatpush1.bf16.msra.mxu0 0
  %807 = vmatprep.subr.bf16.mxu0 0
  %808 = vmatpush1.bf16.msra.mxu0 0
  %809 = vmatprep.subr.bf16.mxu0 0
  %810 = vmatpush1.bf16.msra.mxu0 0
  %811 = vmatprep.subr.bf16.mxu0 0
  %812 = vmatpush1.bf16.msra.mxu0 0
  %813 = vmatprep.subr.bf16.mxu0 0
  %814 = vmatpush1.bf16.msra.mxu0 0
  %815 = vmatprep.subr.bf16.mxu0 0
  %816 = vmatpush1.bf16.msra.mxu0 0
  %817 = vmatprep.subr.bf16.mxu0 0
  %818 = vmatpush1.bf16.msra.mxu0 0
  %819 = vmatprep.subr.bf16.mxu0 0
  %820 = vmatpush1.bf16.msra.mxu0 0
  %821 = vmatprep.subr.bf16.mxu0 0
  %822 = vmatpush1.bf16.msra.mxu0 0
  %823 = vmatprep.subr.bf16.mxu0 0
  %824 = vmatpush1.bf16.msra.mxu0 0
  %825 = vmatprep.subr.bf16.mxu0 0
  %826 = vmatpush1.bf16.msra.mxu0 0
  %827 = vmatprep.subr.bf16.mxu0 0
  %828 = vmatpush1.bf16.msra.mxu0 0
  %829 = vmatprep.subr.bf16.mxu0 0
  %830 = vmatpush1.bf16.msra.mxu0 0
  %831 = vmatprep.mubr.bf16.mxu0 0
  %832 = vmatmul.mubr.bf16.gmra.mrb[0].mxu0 %v797
  %v833 = vpop.f32.mrb[0].mxu0
  %v834 = vadd.f32 0.0, %v833
  %v835 = vpop.f32.mrb[0].mxu0
  %v836 = vpop.f32.mrb[0].mxu0
  %v837 = vadd.f32 0.0, %v836
  %v838 = vpop.f32.mrb[0].mxu0
  %839 = vdwg.mxu0
  %v840 = vadd.f32 %v791, %v834
  %v841 = vadd.f32 %v792, %v837
  %v842 = vmul.f32 %v147, 0.5
  %v843 = vmul.f32 %v151, 0.5
  %v844 = vmul.f32 %v147, 0.70710677
  %v845 = vmul.f32 %v151, 0.70710677
  %v846 = verf.f32.pop %v844
  %v847 = verf.f32.pop %v845
  %v848 = vadd.f32 %v846, 1.0
  %v849 = vadd.f32 %v847, 1.0
  %v850 = vmul.f32 %v842, %v848
  %v851 = vmul.f32 %v843, %v849
  %v852 = vpack.c.bf16 %v851, %v850
  %v853 = vld [vmem:[%s10] sm:$0xf]
  %v854 = vld [vmem:[%s10 + $0x4] sm:$0xf]
  %v855 = vld [vmem:[%s10 + $0x8] sm:$0xf]
  %v856 = vld [vmem:[%s10 + $0xc] sm:$0xf]
  %v857 = vld [vmem:[%s10 + $0x10] sm:$0xf]
  %v858 = vld [vmem:[%s10 + $0x14] sm:$0xf]
  %v859 = vld [vmem:[%s10 + $0x18] sm:$0xf]
  %v860 = vld [vmem:[%s10 + $0x1c] sm:$0xf]
  %v861 = vld [vmem:[%s10 + $0x20] sm:$0xf]
  %v862 = vld [vmem:[%s10 + $0x24] sm:$0xf]
  %v863 = vld [vmem:[%s10 + $0x28] sm:$0xf]
  %v864 = vld [vmem:[%s10 + $0x2c] sm:$0xf]
  %v865 = vld [vmem:[%s10 + $0x30] sm:$0xf]
  %v866 = vld [vmem:[%s10 + $0x34] sm:$0xf]
  %v867 = vld [vmem:[%s10 + $0x38] sm:$0xf]
  %v868 = vld [vmem:[%s10 + $0x3c] sm:$0xf]
  %v885 = vunpack.c.l.b16 %v853
  %v886 = vunpack.c.l.b16 %v854
  %v887 = vunpack.c.l.b16 %v855
  %v888 = vunpack.c.l.b16 %v856
  %v889 = vunpack.c.l.b16 %v857
  %v890 = vunpack.c.l.b16 %v858
  %v891 = vunpack.c.l.b16 %v859
  %v892 = vunpack.c.l.b16 %v860
  %v893 = vunpack.c.l.b16 %v861
  %v894 = vunpack.c.l.b16 %v862
  %v895 = vunpack.c.l.b16 %v863
  %v896 = vunpack.c.l.b16 %v864
  %v897 = vunpack.c.l.b16 %v865
  %v898 = vunpack.c.l.b16 %v866
  %v899 = vunpack.c.l.b16 %v867
  %v900 = vunpack.c.l.b16 %v868
  %v901 = vpack.c.b16 %v886, %v885
  %v902 = vpack.c.b16 %v888, %v887
  %v903 = vpack.c.b16 %v890, %v889
  %v904 = vpack.c.b16 %v892, %v891
  %v905 = vpack.c.b16 %v894, %v893
  %v906 = vpack.c.b16 %v896, %v895
  %v907 = vpack.c.b16 %v898, %v897
  %v908 = vpack.c.b16 %v900, %v899
  %917 = vmatprep.subr.bf16.mxu0 0
  %918 = vmatpush1.bf16.msra.mxu0 %v901
  %919 = vmatprep.subr.bf16.mxu0 0
  %920 = vmatpush1.bf16.msra.mxu0 %v902
  %921 = vmatprep.subr.bf16.mxu0 0
  %922 = vmatpush1.bf16.msra.mxu0 %v903
  %923 = vmatprep.subr.bf16.mxu0 0
  %924 = vmatpush1.bf16.msra.mxu0 %v904
  %925 = vmatprep.subr.bf16.mxu0 0
  %926 = vmatpush1.bf16.msra.mxu0 %v905
  %927 = vmatprep.subr.bf16.mxu0 0
  %928 = vmatpush1.bf16.msra.mxu0 %v906
  %929 = vmatprep.subr.bf16.mxu0 0
  %930 = vmatpush1.bf16.msra.mxu0 %v907
  %931 = vmatprep.subr.bf16.mxu0 0
  %932 = vmatpush1.bf16.msra.mxu0 %v908
  %933 = vmatprep.subr.bf16.mxu0 0
  %934 = vmatpush1.bf16.msra.mxu0 0
  %935 = vmatprep.subr.bf16.mxu0 0
  %936 = vmatpush1.bf16.msra.mxu0 0
  %937 = vmatprep.subr.bf16.mxu0 0
  %938 = vmatpush1.bf16.msra.mxu0 0
  %939 = vmatprep.subr.bf16.mxu0 0
  %940 = vmatpush1.bf16.msra.mxu0 0
  %941 = vmatprep.subr.bf16.mxu0 0
  %942 = vmatpush1.bf16.msra.mxu0 0
  %943 = vmatprep.subr.bf16.mxu0 0
  %944 = vmatpush1.bf16.msra.mxu0 0
  %945 = vmatprep.subr.bf16.mxu0 0
  %946 = vmatpush1.bf16.msra.mxu0 0
  %947 = vmatprep.subr.bf16.mxu0 0
  %948 = vmatpush1.bf16.msra.mxu0 0
  %949 = vmatprep.mubr.bf16.mxu0 0
  %950 = vmatmul.mubr.bf16.gmra.mrb[0].mxu0 %v852
  %v951 = vpop.f32.mrb[0].mxu0
  %v952 = vadd.f32 0.0, %v951
  %v953 = vpop.f32.mrb[0].mxu0
  %v954 = vpop.f32.mrb[0].mxu0
  %v955 = vadd.f32 0.0, %v954
  %v956 = vpop.f32.mrb[0].mxu0
  %957 = vdwg.mxu0
  %v958 = vadd.f32 %v42, %v840
  %v959 = vadd.f32 %v43, %v841
  %v960 = vadd.f32 %v958, %v952
  %v961 = vadd.f32 %v959, %v955
  %v962 = vld [vmem:[%s11] sm:$0xff]
  %v963 = vld [vmem:[%s11 + $0x8] sm:$0xff]
  %v965 = vsel %vm263, %v962, 0
  %967 = vmatprep.subr.mxu0 0.0
  %968 = vmatpush1.msra.mxu0 %v960
  %969 = vmatprep.subr.mxu0 0.0
  %970 = vmatpush1.msra.mxu0 %v961
  %971 = vmatprep.subr.mxu0 0.0
  %972 = vmatpush1.msra.mxu0 0.0
  %973 = vmatprep.subr.mxu0 0.0
  %974 = vmatpush1.msra.mxu0 0.0
  %975 = vmatprep.subr.mxu0 0.0
  %976 = vmatpush1.msra.mxu0 0.0
  %977 = vmatprep.subr.mxu0 0.0
  %978 = vmatpush1.msra.mxu0 0.0
  %979 = vmatprep.subr.mxu0 0.0
  %980 = vmatpush1.msra.mxu0 0.0
  %981 = vmatprep.subr.mxu0 0.0
  %982 = vmatpush1.msra.mxu0 0.0
  %983 = vmatprep.subr.mxu0 0.0
  %984 = vmatpush1.msra.mxu0 0.0
  %985 = vmatprep.subr.mxu0 0.0
  %986 = vmatpush1.msra.mxu0 0.0
  %987 = vmatprep.subr.mxu0 0.0
  %988 = vmatpush1.msra.mxu0 0.0
  %989 = vmatprep.subr.mxu0 0.0
  %990 = vmatpush1.msra.mxu0 0.0
  %991 = vmatprep.subr.mxu0 0.0
  %992 = vmatpush1.msra.mxu0 0.0
  %993 = vmatprep.subr.mxu0 0.0
  %994 = vmatpush1.msra.mxu0 0.0
  %995 = vmatprep.subr.mxu0 0.0
  %996 = vmatpush1.msra.mxu0 0.0
  %997 = vmatprep.subr.mxu0 0.0
  %998 = vmatpush1.msra.mxu0 0.0
  %999 = vmatprep.subr.mxu0 0.0
  %1000 = vmatpush1.msra.mxu0 0.0
  %1001 = vmatprep.subr.mxu0 0.0
  %1002 = vmatpush1.msra.mxu0 0.0
  %1003 = vmatprep.subr.mxu0 0.0
  %1004 = vmatpush1.msra.mxu0 0.0
  %1005 = vmatprep.subr.mxu0 0.0
  %1006 = vmatpush1.msra.mxu0 0.0
  %1007 = vmatprep.subr.mxu0 0.0
  %1008 = vmatpush1.msra.mxu0 0.0
  %1009 = vmatprep.subr.mxu0 0.0
  %1010 = vmatpush1.msra.mxu0 0.0
  %1011 = vmatprep.subr.mxu0 0.0
  %1012 = vmatpush1.msra.mxu0 0.0
  %1013 = vmatprep.subr.mxu0 0.0
  %1014 = vmatpush1.msra.mxu0 0.0
  %1015 = vmatprep.subr.mxu0 0.0
  %1016 = vmatpush1.msra.mxu0 0.0
  %1017 = vmatprep.subr.mxu0 0.0
  %1018 = vmatpush1.msra.mxu0 0.0
  %1019 = vmatprep.subr.mxu0 0.0
  %1020 = vmatpush1.msra.mxu0 0.0
  %1021 = vmatprep.subr.mxu0 0.0
  %1022 = vmatpush1.msra.mxu0 0.0
  %1023 = vmatprep.subr.mxu0 0.0
  %1024 = vmatpush1.msra.mxu0 0.0
  %1025 = vmatprep.subr.mxu0 0.0
  %1026 = vmatpush1.msra.mxu0 0.0
  %1027 = vmatprep.subr.mxu0 0.0
  %1028 = vmatpush1.msra.mxu0 0.0
  %1029 = vmatprep.subr.mxu0 0.0
  %1030 = vmatpush1.msra.mxu0 0.0
  %1031 = vmatprep.mubr.f32.mxu0 0.0
  %1032 = vmatmul.mubr.f32.gmra.mrb[0].mxu0 %v965
  %v1033 = vpop.f32.mrb[0].mxu0
  %v1034 = vadd.f32 0.0, %v1033
  %v1035 = vpop.f32.mrb[0].mxu0
  %1036 = vdwg.mxu0
  %v1037 = vrot.slane %v962, 4
  %v1038 = vsel %vm263, %v1037, 0
  %1040 = vmatprep.subr.mxu0 0.0
  %1041 = vmatpush1.msra.mxu0 %v960
  %1042 = vmatprep.subr.mxu0 0.0
  %1043 = vmatpush1.msra.mxu0 %v961
  %1044 = vmatprep.subr.mxu0 0.0
  %1045 = vmatpush1.msra.mxu0 0.0
  %1046 = vmatprep.subr.mxu0 0.0
  %1047 = vmatpush1.msra.mxu0 0.0
  %1048 = vmatprep.subr.mxu0 0.0
  %1049 = vmatpush1.msra.mxu0 0.0
  %1050 = vmatprep.subr.mxu0 0.0
  %1051 = vmatpush1.msra.mxu0 0.0
  %1052 = vmatprep.subr.mxu0 0.0
  %1053 = vmatpush1.msra.mxu0 0.0
  %1054 = vmatprep.subr.mxu0 0.0
  %1055 = vmatpush1.msra.mxu0 0.0
  %1056 = vmatprep.subr.mxu0 0.0
  %1057 = vmatpush1.msra.mxu0 0.0
  %1058 = vmatprep.subr.mxu0 0.0
  %1059 = vmatpush1.msra.mxu0 0.0
  %1060 = vmatprep.subr.mxu0 0.0
  %1061 = vmatpush1.msra.mxu0 0.0
  %1062 = vmatprep.subr.mxu0 0.0
  %1063 = vmatpush1.msra.mxu0 0.0
  %1064 = vmatprep.subr.mxu0 0.0
  %1065 = vmatpush1.msra.mxu0 0.0
  %1066 = vmatprep.subr.mxu0 0.0
  %1067 = vmatpush1.msra.mxu0 0.0
  %1068 = vmatprep.subr.mxu0 0.0
  %1069 = vmatpush1.msra.mxu0 0.0
  %1070 = vmatprep.subr.mxu0 0.0
  %1071 = vmatpush1.msra.mxu0 0.0
  %1072 = vmatprep.subr.mxu0 0.0
  %1073 = vmatpush1.msra.mxu0 0.0
  %1074 = vmatprep.subr.mxu0 0.0
  %1075 = vmatpush1.msra.mxu0 0.0
  %1076 = vmatprep.subr.mxu0 0.0
  %1077 = vmatpush1.msra.mxu0 0.0
  %1078 = vmatprep.subr.mxu0 0.0
  %1079 = vmatpush1.msra.mxu0 0.0
  %1080 = vmatprep.subr.mxu0 0.0
  %1081 = vmatpush1.msra.mxu0 0.0
  %1082 = vmatprep.subr.mxu0 0.0
  %1083 = vmatpush1.msra.mxu0 0.0
  %1084 = vmatprep.subr.mxu0 0.0
  %1085 = vmatpush1.msra.mxu0 0.0
  %1086 = vmatprep.subr.mxu0 0.0
  %1087 = vmatpush1.msra.mxu0 0.0
  %1088 = vmatprep.subr.mxu0 0.0
  %1089 = vmatpush1.msra.mxu0 0.0
  %1090 = vmatprep.subr.mxu0 0.0
  %1091 = vmatpush1.msra.mxu0 0.0
  %1092 = vmatprep.subr.mxu0 0.0
  %1093 = vmatpush1.msra.mxu0 0.0
  %1094 = vmatprep.subr.mxu0 0.0
  %1095 = vmatpush1.msra.mxu0 0.0
  %1096 = vmatprep.subr.mxu0 0.0
  %1097 = vmatpush1.msra.mxu0 0.0
  %1098 = vmatprep.subr.mxu0 0.0
  %1099 = vmatpush1.msra.mxu0 0.0
  %1100 = vmatprep.subr.mxu0 0.0
  %1101 = vmatpush1.msra.mxu0 0.0
  %1102 = vmatprep.subr.mxu0 0.0
  %1103 = vmatpush1.msra.mxu0 0.0
  %1104 = vmatprep.mubr.f32.mxu0 0.0
  %1105 = vmatmul.mubr.f32.gmra.mrb[0].mxu0 %v1038
  %v1106 = vpop.f32.mrb[0].mxu0
  %v1107 = vadd.f32 0.0, %v1106
  %v1108 = vpop.f32.mrb[0].mxu0
  %1109 = vdwg.mxu0
  %v1111 = vsel %vm263, %v963, 0
  %1113 = vmatprep.subr.mxu0 0.0
  %1114 = vmatpush1.msra.mxu0 %v960
  %1115 = vmatprep.subr.mxu0 0.0
  %1116 = vmatpush1.msra.mxu0 %v961
  %1117 = vmatprep.subr.mxu0 0.0
  %1118 = vmatpush1.msra.mxu0 0.0
  %1119 = vmatprep.subr.mxu0 0.0
  %1120 = vmatpush1.msra.mxu0 0.0
  %1121 = vmatprep.subr.mxu0 0.0
  %1122 = vmatpush1.msra.mxu0 0.0
  %1123 = vmatprep.subr.mxu0 0.0
  %1124 = vmatpush1.msra.mxu0 0.0
  %1125 = vmatprep.subr.mxu0 0.0
  %1126 = vmatpush1.msra.mxu0 0.0
  %1127 = vmatprep.subr.mxu0 0.0
  %1128 = vmatpush1.msra.mxu0 0.0
  %1129 = vmatprep.subr.mxu0 0.0
  %1130 = vmatpush1.msra.mxu0 0.0
  %1131 = vmatprep.subr.mxu0 0.0
  %1132 = vmatpush1.msra.mxu0 0.0
  %1133 = vmatprep.subr.mxu0 0.0
  %1134 = vmatpush1.msra.mxu0 0.0
  %1135 = vmatprep.subr.mxu0 0.0
  %1136 = vmatpush1.msra.mxu0 0.0
  %1137 = vmatprep.subr.mxu0 0.0
  %1138 = vmatpush1.msra.mxu0 0.0
  %1139 = vmatprep.subr.mxu0 0.0
  %1140 = vmatpush1.msra.mxu0 0.0
  %1141 = vmatprep.subr.mxu0 0.0
  %1142 = vmatpush1.msra.mxu0 0.0
  %1143 = vmatprep.subr.mxu0 0.0
  %1144 = vmatpush1.msra.mxu0 0.0
  %1145 = vmatprep.subr.mxu0 0.0
  %1146 = vmatpush1.msra.mxu0 0.0
  %1147 = vmatprep.subr.mxu0 0.0
  %1148 = vmatpush1.msra.mxu0 0.0
  %1149 = vmatprep.subr.mxu0 0.0
  %1150 = vmatpush1.msra.mxu0 0.0
  %1151 = vmatprep.subr.mxu0 0.0
  %1152 = vmatpush1.msra.mxu0 0.0
  %1153 = vmatprep.subr.mxu0 0.0
  %1154 = vmatpush1.msra.mxu0 0.0
  %1155 = vmatprep.subr.mxu0 0.0
  %1156 = vmatpush1.msra.mxu0 0.0
  %1157 = vmatprep.subr.mxu0 0.0
  %1158 = vmatpush1.msra.mxu0 0.0
  %1159 = vmatprep.subr.mxu0 0.0
  %1160 = vmatpush1.msra.mxu0 0.0
  %1161 = vmatprep.subr.mxu0 0.0
  %1162 = vmatpush1.msra.mxu0 0.0
  %1163 = vmatprep.subr.mxu0 0.0
  %1164 = vmatpush1.msra.mxu0 0.0
  %1165 = vmatprep.subr.mxu0 0.0
  %1166 = vmatpush1.msra.mxu0 0.0
  %1167 = vmatprep.subr.mxu0 0.0
  %1168 = vmatpush1.msra.mxu0 0.0
  %1169 = vmatprep.subr.mxu0 0.0
  %1170 = vmatpush1.msra.mxu0 0.0
  %1171 = vmatprep.subr.mxu0 0.0
  %1172 = vmatpush1.msra.mxu0 0.0
  %1173 = vmatprep.subr.mxu0 0.0
  %1174 = vmatpush1.msra.mxu0 0.0
  %1175 = vmatprep.subr.mxu0 0.0
  %1176 = vmatpush1.msra.mxu0 0.0
  %1177 = vmatprep.mubr.f32.mxu0 0.0
  %1178 = vmatmul.mubr.f32.gmra.mrb[0].mxu0 %v1111
  %v1179 = vpop.f32.mrb[0].mxu0
  %v1180 = vadd.f32 0.0, %v1179
  %v1181 = vpop.f32.mrb[0].mxu0
  %1182 = vdwg.mxu0
  %v1183 = vrot.slane %v963, 4
  %v1184 = vsel %vm263, %v1183, 0
  %1186 = vmatprep.subr.mxu0 0.0
  %1187 = vmatpush1.msra.mxu0 %v960
  %1188 = vmatprep.subr.mxu0 0.0
  %1189 = vmatpush1.msra.mxu0 %v961
  %1190 = vmatprep.subr.mxu0 0.0
  %1191 = vmatpush1.msra.mxu0 0.0
  %1192 = vmatprep.subr.mxu0 0.0
  %1193 = vmatpush1.msra.mxu0 0.0
  %1194 = vmatprep.subr.mxu0 0.0
  %1195 = vmatpush1.msra.mxu0 0.0
  %1196 = vmatprep.subr.mxu0 0.0
  %1197 = vmatpush1.msra.mxu0 0.0
  %1198 = vmatprep.subr.mxu0 0.0
  %1199 = vmatpush1.msra.mxu0 0.0
  %1200 = vmatprep.subr.mxu0 0.0
  %1201 = vmatpush1.msra.mxu0 0.0
  %1202 = vmatprep.subr.mxu0 0.0
  %1203 = vmatpush1.msra.mxu0 0.0
  %1204 = vmatprep.subr.mxu0 0.0
  %1205 = vmatpush1.msra.mxu0 0.0
  %1206 = vmatprep.subr.mxu0 0.0
  %1207 = vmatpush1.msra.mxu0 0.0
  %1208 = vmatprep.subr.mxu0 0.0
  %1209 = vmatpush1.msra.mxu0 0.0
  %1210 = vmatprep.subr.mxu0 0.0
  %1211 = vmatpush1.msra.mxu0 0.0
  %1212 = vmatprep.subr.mxu0 0.0
  %1213 = vmatpush1.msra.mxu0 0.0
  %1214 = vmatprep.subr.mxu0 0.0
  %1215 = vmatpush1.msra.mxu0 0.0
  %1216 = vmatprep.subr.mxu0 0.0
  %1217 = vmatpush1.msra.mxu0 0.0
  %1218 = vmatprep.subr.mxu0 0.0
  %1219 = vmatpush1.msra.mxu0 0.0
  %1220 = vmatprep.subr.mxu0 0.0
  %1221 = vmatpush1.msra.mxu0 0.0
  %1222 = vmatprep.subr.mxu0 0.0
  %1223 = vmatpush1.msra.mxu0 0.0
  %1224 = vmatprep.subr.mxu0 0.0
  %1225 = vmatpush1.msra.mxu0 0.0
  %1226 = vmatprep.subr.mxu0 0.0
  %1227 = vmatpush1.msra.mxu0 0.0
  %1228 = vmatprep.subr.mxu0 0.0
  %1229 = vmatpush1.msra.mxu0 0.0
  %1230 = vmatprep.subr.mxu0 0.0
  %1231 = vmatpush1.msra.mxu0 0.0
  %1232 = vmatprep.subr.mxu0 0.0
  %1233 = vmatpush1.msra.mxu0 0.0
  %1234 = vmatprep.subr.mxu0 0.0
  %1235 = vmatpush1.msra.mxu0 0.0
  %1236 = vmatprep.subr.mxu0 0.0
  %1237 = vmatpush1.msra.mxu0 0.0
  %1238 = vmatprep.subr.mxu0 0.0
  %1239 = vmatpush1.msra.mxu0 0.0
  %1240 = vmatprep.subr.mxu0 0.0
  %1241 = vmatpush1.msra.mxu0 0.0
  %1242 = vmatprep.subr.mxu0 0.0
  %1243 = vmatpush1.msra.mxu0 0.0
  %1244 = vmatprep.subr.mxu0 0.0
  %1245 = vmatpush1.msra.mxu0 0.0
  %1246 = vmatprep.subr.mxu0 0.0
  %1247 = vmatpush1.msra.mxu0 0.0
  %1248 = vmatprep.subr.mxu0 0.0
  %1249 = vmatpush1.msra.mxu0 0.0
  %1250 = vmatprep.mubr.f32.mxu0 0.0
  %1251 = vmatmul.mubr.f32.gmra.mrb[0].mxu0 %v1184
  %v1252 = vpop.f32.mrb[0].mxu0
  %v1253 = vadd.f32 0.0, %v1252
  %v1254 = vpop.f32.mrb[0].mxu0
  %1255 = vdwg.mxu0
  %1257 = vrot.lane.b32.xlu0 %v1107, 32
  %v1258 = vpop.permute.xlu0 %1257
  %1261 = vrot.lane.b32.xlu0 %v1180, 64
  %v1262 = vpop.permute.xlu0 %1261
  %1265 = vrot.lane.b32.xlu0 %v1253, 96
  %v1266 = vpop.permute.xlu0 %1265
  %v1268 = vsel %vm44, %v1034, %v1258
  %v1269 = vsel %vm167, %v1268, %v1262
  %vm1270 = vcmask 785408
  %v1271 = vsel %vm1270, %v1269, %v1266
  %1272 = vst [vmem:[%s12] sm:$0xf] %v1271
  // Predicated region
  $region50: #{falcon_decoder.1} parent=0 // pred_check
    _
  $region51: #{falcon_decoder.1} parent=0 // pred_check_branch
    %1274 = sbr.rel (0) target = $region53
  $region52: #{falcon_decoder.1} parent=0 // pred_region
    _
  $region53: #{falcon_decoder.1} parent=0 // pred_fallthru
    _
  // Predicated region
  $region54: #{falcon_decoder.1} parent=0 // pred_check
    _
  $region55: #{falcon_decoder.1} parent=0 // pred_check_branch
    %1276 = sbr.rel (0) target = $region57
  $region56: #{falcon_decoder.1} parent=0 // pred_region
    _
  $region57: #{falcon_decoder.1} parent=0 // pred_fallthru
    _

</llo_original>
